<compile_context>
chip_gen: v5e
topology: v5e:2x2
jax: 0.10.0
libtpu: 0.0.40
codegen_flags: <defaults>
</compile_context>

<pallas_src>
import math
import numpy as np
import jax
import jax.numpy as jnp
from jax.experimental import pallas as pl
from jax.experimental.pallas import tpu as pltpu

# ---------------- config (small, consistent with the module) ----------------
N_NODES = 4          # "bsz" of node hidden states
N_EDGES = 6
L = 8                # q_len
D = 64               # hidden_size
H = 2                # num_attention_heads
HKV = 1              # num_key_value_heads
DH = D // H          # head_dim = 32
KVD = HKV * DH       # 32
GROUPS = H // HKV    # num_key_value_groups
QKV = H * DH + 2 * KVD   # 128 : fused [q | k | v] width
IM = 128             # intermediate_size (MistralMLP)
EPS = 1e-6           # rms_norm_eps
THETA = 10000.0      # rope_theta


# ---------------------------- helper tables ---------------------------------
def rope_table(positions):  # used by the pure-JAX reference
    inv_freq = 1.0 / (THETA ** (np.arange(0, DH, 2, dtype=np.float32) / DH))
    freqs = np.asarray(positions, np.float32)[:, None] * inv_freq[None, :]
    emb = np.concatenate([freqs, freqs], axis=-1)            # (len, DH)
    return jnp.asarray(np.cos(emb)), jnp.asarray(np.sin(emb))


def build_rope_templates():
    """Compact per-position cos/sin templates, shape (2L, QKV): rows [0, L) are the
    node-row template, rows [L, 2L) the edge-row template; columns follow the fused
    [q|k|v] slab layout.  V columns get cos=1/sin=0 (no rotation); edge q columns
    are unused (cos=1/sin=0)."""
    inv_freq = 1.0 / (THETA ** (np.arange(0, DH, 2, dtype=np.float32) / DH))

    def cs(pos):
        f = np.asarray(pos, np.float32)[:, None] * inv_freq[None, :]
        emb = np.concatenate([f, f], axis=-1)                # (L, DH)
        return np.cos(emb), np.sin(emb)

    cq, sq = cs(np.arange(L))                 # query positions 0..L-1
    ckn, skn = cs(2 * np.arange(L))           # node keys -> even positions
    cke, ske = cs(2 * np.arange(L) + 1)       # edge keys -> odd positions
    one_v = np.ones((L, KVD), np.float32)
    zero_v = np.zeros((L, KVD), np.float32)

    node_cos = np.concatenate([np.tile(cq, (1, H)), np.tile(ckn, (1, HKV)), one_v], 1)
    node_sin = np.concatenate([np.tile(sq, (1, H)), np.tile(skn, (1, HKV)), zero_v], 1)
    edge_cos = np.concatenate([np.ones((L, H * DH), np.float32),
                               np.tile(cke, (1, HKV)), one_v], 1)
    edge_sin = np.concatenate([np.zeros((L, H * DH), np.float32),
                               np.tile(ske, (1, HKV)), zero_v], 1)
    cos = np.concatenate([node_cos, edge_cos], axis=0)       # (2L, QKV)
    sin = np.concatenate([node_sin, edge_sin], axis=0)
    return jnp.asarray(cos), jnp.asarray(sin)


# ------------------------------ fused kernel ---------------------------------
def make_fused_kernel(n_nodes, n_edges, max_deg):
    NL, EL = n_nodes * L, n_edges * L
    R = NL + EL
    S = max_deg * 2 * L          # gathered key rows per node (padded in-degree)
    NS = n_nodes * S
    BF = jnp.bfloat16

    def kernel(slot_ref,                         # SMEM (2*n_nodes*max_deg,) int32
               xn_ref, xe_ref,                   # (NL, D) node rows / (EL, D) edge rows
               wln1_ref, wqkv_ref,               # (1, D) f32 / (D, QKV) bf16
               cos_ref, sin_ref,                 # (2L, QKV) f32 RoPE templates
               bias_ref,                         # (GROUPS*NL, NS) f32 additive mask
               wo_ref, wln2_ref, wgu_ref, wd_ref,
               out_ref,                          # (NL, D) f32
               kvslab_ref, kvg_ref):             # VMEM scratch (R, 2*KVD) / (NS, 2*KVD)
        # ---- input RMSNorm + fused [q|k|v] projection (bf16 MXU, f32 acc) ----
        x = jnp.concatenate([xn_ref[...], xe_ref[...]], axis=0)           # (R, D)
        var = jnp.mean(x * x, axis=-1, keepdims=True)
        xh = (x * jax.lax.rsqrt(var + EPS) * wln1_ref[...]).astype(BF)
        slab = jnp.dot(xh, wqkv_ref[...], preferred_element_type=jnp.float32)

        # ---- RoPE: blocked rotate_half = per-DH-block lane half-swap (XLU) ----
        cos = jnp.concatenate([cos_ref[0:L, :]] * n_nodes
                              + [cos_ref[L:2 * L, :]] * n_edges, axis=0)  # (R, QKV)
        sin = jnp.concatenate([sin_ref[0:L, :]] * n_nodes
                              + [sin_ref[L:2 * L, :]] * n_edges, axis=0)
        parts = []
        for b in range(H + HKV):                 # q and k head blocks get rotated
            lo = slab[:, b * DH:b * DH + DH // 2]
            hi = slab[:, b * DH + DH // 2:(b + 1) * DH]
            parts += [-hi, lo]
        parts.append(slab[:, (H + HKV) * DH:])   # v block: sin == 0, value unused
        rot = jnp.concatenate(parts, axis=1)
        slab = slab * cos + rot * sin                                     # (R, QKV)

        q_nodes = slab[:NL, :H * DH]             # (NL, H*DH) rotated queries
        kvslab_ref[...] = slab[:, H * DH:]       # (R, 2*KVD) rotated [keys | values]

        # ---- per-node KV gather from the VMEM slab via the SMEM slot table ----
        # slot_ref[:n*deg]  = source-node index per (node, slot)
        # slot_ref[n*deg:]  = edge index per (node, slot); padded slots point at 0
        #                     and are killed by bias_ref in the softmax below.
        for n in range(n_nodes):
            for d in range(max_deg):
                sl = n * max_deg + d
                src_row = pl.multiple_of(slot_ref[sl] * L, L)
                edg_row = pl.multiple_of(NL + slot_ref[n_nodes * max_deg + sl] * L, L)
                base = sl * 2 * L
                kvg_ref[base:base + L, :] = kvslab_ref[pl.ds(src_row, L), :]
                kvg_ref[base + L:base + 2 * L, :] = kvslab_ref[pl.ds(edg_row, L), :]

        # ---- block-diagonal batched attention + head-accumulated o_proj ----
        kv = kvg_ref[...]                        # (NS, 2*KVD)
        o_proj = jnp.zeros((NL, D), jnp.float32)
        for kvh in range(HKV):
            k_h = kv[:, kvh * DH:(kvh + 1) * DH].astype(BF)               # (NS, DH)
            v_h = kv[:, KVD + kvh * DH:KVD + (kvh + 1) * DH].astype(BF)   # (NS, DH)
            q_hm = jnp.concatenate(              # head-major query rows (G*NL, DH)
                [q_nodes[:, (kvh * GROUPS + g) * DH:(kvh * GROUPS + g + 1) * DH]
                 for g in range(GROUPS)], axis=0).astype(BF)
            s = jax.lax.dot_general(q_hm, k_h, (((1,), (1,)), ((), ())),
                                    preferred_element_type=jnp.float32)   # (G*NL, NS)
            s = s + bias_ref[...]                # block-diag + padded-slot mask bias
            m = jnp.maximum(jnp.max(s, axis=-1, keepdims=True), 0.0)
            e = jnp.exp(s - m)                   # masked columns underflow to 0 exactly
            p = e * pl.reciprocal(jnp.sum(e, axis=-1, keepdims=True) + 1e-16,
                                  approx=True)   # PyG scatter-softmax semantics
            o = jnp.dot(p.astype(BF), v_h, preferred_element_type=jnp.float32)
            for g in range(GROUPS):              # fold per-head concat into o_proj
                h = kvh * GROUPS + g
                o_proj = o_proj + jnp.dot(o[g * NL:(g + 1) * NL, :].astype(BF),
                                          wo_ref[h * DH:(h + 1) * DH, :],
                                          preferred_element_type=jnp.float32)

        # ---- gated residual + post-attn RMSNorm + MistralMLP + gated residual ----
        h1 = xn_ref[...] + o_proj                # tanh(attn_gate) folded into Wo
        var2 = jnp.mean(h1 * h1, axis=-1, keepdims=True)
        hn = (h1 * jax.lax.rsqrt(var2 + EPS) * wln2_ref[...]).astype(BF)
        gu = jnp.dot(hn, wgu_ref[...], preferred_element_type=jnp.float32)  # (NL, 2*IM)
        act = (jax.nn.silu(gu[:, :IM]) * gu[:, IM:]).astype(BF)
        mlp = jnp.dot(act, wd_ref[...], preferred_element_type=jnp.float32)
        out_ref[...] = h1 + mlp                  # tanh(ff_gate) folded into W_down

    return kernel


# ------------------------------ wrapper --------------------------------------
def gofa_gated_decoder_layer(params, hidden_states, edge_hidden_states, edge_index):
    src = np.asarray(edge_index[0])
    tgt = np.asarray(edge_index[1])
    n_nodes, n_edges = hidden_states.shape[0], edge_hidden_states.shape[0]
    NL, EL = n_nodes * L, n_edges * L

    # ---- host-side graph preprocessing: pad variable in-degree to max_deg ----
    # (only max_deg affects shapes; the slot table / bias carry the graph values,
    #  so a new edge_index with the same max_deg does not force recompilation)
    max_deg = max(1, int(np.max(np.bincount(tgt, minlength=n_nodes))))
    S = max_deg * 2 * L
    NS = n_nodes * S
    slot_src = np.zeros((n_nodes, max_deg), np.int32)
    slot_edge = np.zeros((n_nodes, max_deg), np.int32)
    valid = np.zeros((n_nodes, max_deg), np.bool_)
    cnt = np.zeros(n_nodes, np.int32)
    for e in range(n_edges):
        t = int(tgt[e])
        slot_src[t, cnt[t]] = int(src[e])
        slot_edge[t, cnt[t]] = e
        valid[t, cnt[t]] = True
        cnt[t] += 1
    slot_tab = jnp.asarray(np.concatenate([slot_src.reshape(-1),
                                           slot_edge.reshape(-1)]).astype(np.int32))
    # additive mask bias: 0 on a query row's own valid slots, -1e30 everywhere else
    bias_np = np.full((GROUPS * NL, NS), -1e30, np.float32)
    for n in range(n_nodes):
        for d in range(max_deg):
            if valid[n, d]:
                c0 = (n * max_deg + d) * 2 * L
                for g in range(GROUPS):
                    r0 = g * NL + n * L
                    bias_np[r0:r0 + L, c0:c0 + 2 * L] = 0.0
    bias = jnp.asarray(bias_np)

    # ---- host-folded weights (scale + tanh gates), cast to bf16 for the MXU ----
    wqkv = jnp.concatenate([params["wq"] / math.sqrt(DH), params["wk"],
                            params["wv"]], axis=1).astype(jnp.bfloat16)      # (D, QKV)
    wo_g = (params["wo"] * jnp.tanh(params["attn_gate"])).astype(jnp.bfloat16)
    wgu = jnp.concatenate([params["w_gate"], params["w_up"]],
                          axis=1).astype(jnp.bfloat16)                       # (D, 2*IM)
    wd_g = (params["w_down"] * jnp.tanh(params["ff_gate"])).astype(jnp.bfloat16)
    wln1 = params["w_ln1"].reshape(1, D)
    wln2 = params["w_ln2"].reshape(1, D)
    cos_tab, sin_tab = build_rope_templates()                                # (2L, QKV)

    x_node = hidden_states.reshape(NL, D)
    x_edge = edge_hidden_states.reshape(EL, D)

    grid_spec = pltpu.PrefetchScalarGridSpec(
        num_scalar_prefetch=1,
        grid=(1,),
        in_specs=[
            pl.BlockSpec((NL, D), lambda i, st: (0, 0)),            # node rows
            pl.BlockSpec((EL, D), lambda i, st: (0, 0)),            # edge rows
            pl.BlockSpec((1, D), lambda i, st: (0, 0)),             # w_ln1
            pl.BlockSpec((D, QKV), lambda i, st: (0, 0)),           # fused Wqkv (bf16)
            pl.BlockSpec((2 * L, QKV), lambda i, st: (0, 0)),       # cos template
            pl.BlockSpec((2 * L, QKV), lambda i, st: (0, 0)),       # sin template
            pl.BlockSpec((GROUPS * NL, NS), lambda i, st: (0, 0)),  # mask bias
            pl.BlockSpec((D, D), lambda i, st: (0, 0)),             # Wo * tanh(gate)
            pl.BlockSpec((1, D), lambda i, st: (0, 0)),             # w_ln2
            pl.BlockSpec((D, 2 * IM), lambda i, st: (0, 0)),        # [W_gate|W_up]
            pl.BlockSpec((IM, D), lambda i, st: (0, 0)),            # W_down * tanh(gate)
        ],
        out_specs=pl.BlockSpec((NL, D), lambda i, st: (0, 0)),
        scratch_shapes=[
            pltpu.VMEM((NL + EL, 2 * KVD), jnp.float32),   # rotated [k|v] slab
            pltpu.VMEM((NS, 2 * KVD), jnp.float32),        # gathered per-node K|V
        ],
    )
    out_flat = pl.pallas_call(
        make_fused_kernel(n_nodes, n_edges, max_deg),
        grid_spec=grid_spec,
        out_shape=jax.ShapeDtypeStruct((NL, D), jnp.float32),
        compiler_params=pltpu.CompilerParams(dimension_semantics=("arbitrary",)),
    )(slot_tab, x_node, x_edge, wln1, wqkv, cos_tab, sin_tab, bias,
      wo_g, wln2, wgu, wd_g)
    return out_flat.reshape(n_nodes, L, D)


# ------------------------- pure-JAX reference --------------------------------
def reference(params, x, ex, edge_index):
    src = np.asarray(edge_index[0])
    tgt = np.asarray(edge_index[1])
    P = jax.lax.Precision.HIGHEST

    def rms(h, w):
        var = jnp.mean(h * h, axis=-1, keepdims=True)
        return h * jax.lax.rsqrt(var + EPS) * w

    def rope_apply(t, pos):                                  # t (..., L, nH, DH)
        cos, sin = rope_table(pos)
        c, s = cos[:, None, :], sin[:, None, :]
        t1, t2 = t[..., : DH // 2], t[..., DH // 2:]
        rot = jnp.concatenate([-t2, t1], axis=-1)
        return t * c + rot * s

    xn, en = rms(x, params["w_ln1"]), rms(ex, params["w_ln1"])
    q = jnp.einsum("nld,df->nlf", xn, params["wq"], precision=P).reshape(-1, L, H, DH)
    kn = jnp.einsum("nld,df->nlf", xn, params["wk"], precision=P).reshape(-1, L, HKV, DH)
    vn = jnp.einsum("nld,df->nlf", xn, params["wv"], precision=P).reshape(-1, L, HKV, DH)
    ke = jnp.einsum("eld,df->elf", en, params["wk"], precision=P).reshape(-1, L, HKV, DH)
    ve = jnp.einsum("eld,df->elf", en, params["wv"], precision=P).reshape(-1, L, HKV, DH)
    q = rope_apply(q, np.arange(L))
    kn = rope_apply(kn, 2 * np.arange(L))
    ke = rope_apply(ke, 2 * np.arange(L) + 1)
    q = jnp.transpose(q, (0, 2, 1, 3))                       # (N, H, L, DH)

    outs = []
    for n in range(x.shape[0]):
        es = [e for e in range(src.shape[0]) if tgt[e] == n]
        K = jnp.concatenate([jnp.concatenate([kn[src[e]], ke[e]], 0) for e in es], 0)
        V = jnp.concatenate([jnp.concatenate([vn[src[e]], ve[e]], 0) for e in es], 0)
        K = jnp.repeat(jnp.transpose(K, (1, 0, 2)), GROUPS, axis=0)   # (H, Sn, DH)
        V = jnp.repeat(jnp.transpose(V, (1, 0, 2)), GROUPS, axis=0)
        s = jnp.einsum("hld,hsd->hls", q[n], K, precision=P) / math.sqrt(DH)
        e_ = jnp.exp(s - jnp.max(s, -1, keepdims=True))
        a = e_ / (jnp.sum(e_, -1, keepdims=True) + 1e-16)
        o = jnp.einsum("hls,hsd->hld", a, V, precision=P)
        outs.append(jnp.transpose(o, (1, 0, 2)).reshape(L, D))
    attn = jnp.einsum("nld,df->nlf", jnp.stack(outs, 0), params["wo"], precision=P)

    h1 = x + jnp.tanh(params["attn_gate"]) * attn
    hn = rms(h1, params["w_ln2"])
    g = jnp.einsum("nld,di->nli", hn, params["w_gate"], precision=P)
    u = jnp.einsum("nld,di->nli", hn, params["w_up"], precision=P)
    mlp = jnp.einsum("nli,id->nld", jax.nn.silu(g) * u, params["w_down"], precision=P)
    return h1 + jnp.tanh(params["ff_gate"]) * mlp


# ------------------------------- params --------------------------------------
def init_params(key):
    ks = jax.random.split(key, 12)

    def lin(k, fin, fout):
        b = 1.0 / math.sqrt(fin)
        return jax.random.uniform(k, (fin, fout), jnp.float32, -b, b)

    return dict(
        w_ln1=1.0 + 0.1 * jax.random.normal(ks[0], (D,), jnp.float32),
        w_ln2=1.0 + 0.1 * jax.random.normal(ks[1], (D,), jnp.float32),
        wq=lin(ks[2], D, H * DH),
        wk=lin(ks[3], D, HKV * DH),
        wv=lin(ks[4], D, HKV * DH),
        wo=lin(ks[5], D, D),
        w_gate=lin(ks[6], D, IM),
        w_up=lin(ks[7], D, IM),
        w_down=lin(ks[8], IM, D),
        attn_gate=jnp.float32(0.5),    # module inits 0.0; nonzero to exercise path
        ff_gate=jnp.float32(-0.25),
    )


if __name__ == "__main__":
    key = jax.random.PRNGKey(0)
    kx, kee, kp = jax.random.split(key, 3)
    hidden_states = jax.random.normal(kx, (N_NODES, L, D), jnp.float32)
    edge_hidden_states = jax.random.normal(kee, (N_EDGES, L, D), jnp.float32)
    # (2, E): row 0 = source, row 1 = target; every node has >= 1 incoming edge
    edge_index = np.array([[0, 1, 2, 3, 0, 2],
                           [1, 2, 3, 0, 2, 1]], dtype=np.int32)
    params = init_params(kp)

    out = gofa_gated_decoder_layer(params, hidden_states, edge_hidden_states, edge_index)
    out = jax.block_until_ready(out)

    ref = reference(params, hidden_states, edge_hidden_states, edge_index)
    assert out.shape == (N_NODES, L, D)
    err = float(jnp.max(jnp.abs(out - ref)))
    # bf16 MXU matmuls vs. f32 HIGHEST-precision reference -> slightly wider tol.
    assert err < 4e-2, f"max abs err {err}"
    print("KERNEL_OK")
</pallas_src>

<mosaic_0001>
module attributes {stable_mosaic.version = 11 : i64} {
  func.func @kernel(%arg0: i32, %arg1: memref<16xi32, #tpu.memory_space<smem>>, %arg2: memref<32x64xf32, #tpu.memory_space<vmem>>, %arg3: memref<48x64xf32, #tpu.memory_space<vmem>>, %arg4: memref<1x64xf32, #tpu.memory_space<vmem>>, %arg5: memref<64x128xbf16, #tpu.memory_space<vmem>>, %arg6: memref<16x128xf32, #tpu.memory_space<vmem>>, %arg7: memref<16x128xf32, #tpu.memory_space<vmem>>, %arg8: memref<64x128xf32, #tpu.memory_space<vmem>>, %arg9: memref<64x64xbf16, #tpu.memory_space<vmem>>, %arg10: memref<1x64xf32, #tpu.memory_space<vmem>>, %arg11: memref<64x256xbf16, #tpu.memory_space<vmem>>, %arg12: memref<128x64xbf16, #tpu.memory_space<vmem>>, %arg13: memref<32x64xf32, #tpu.memory_space<vmem>>, %arg14: memref<80x64xf32, #tpu.memory_space<vmem>>, %arg15: memref<128x64xf32, #tpu.memory_space<vmem>>) attributes {dimension_semantics = [#tpu.dimension_semantics<arbitrary>], iteration_bounds = array<i64: 1>, scalar_prefetch = 1 : i64, scratch_operands = 2 : i64, tpu.core_type = #tpu.core_type<tc>, window_params = [{pipeline_mode = #tpu.pipeline_mode<synchronous>, transform_indices = @transform_0, window_bounds = array<i64: 32, 64>}, {pipeline_mode = #tpu.pipeline_mode<synchronous>, transform_indices = @transform_1, window_bounds = array<i64: 48, 64>}, {pipeline_mode = #tpu.pipeline_mode<synchronous>, transform_indices = @transform_2, window_bounds = array<i64: 1, 64>}, {pipeline_mode = #tpu.pipeline_mode<synchronous>, transform_indices = @transform_3, window_bounds = array<i64: 64, 128>}, {pipeline_mode = #tpu.pipeline_mode<synchronous>, transform_indices = @transform_4, window_bounds = array<i64: 16, 128>}, {pipeline_mode = #tpu.pipeline_mode<synchronous>, transform_indices = @transform_5, window_bounds = array<i64: 16, 128>}, {pipeline_mode = #tpu.pipeline_mode<synchronous>, transform_indices = @transform_6, window_bounds = array<i64: 64, 128>}, {pipeline_mode = #tpu.pipeline_mode<synchronous>, transform_indices = @transform_7, window_bounds = array<i64: 64, 64>}, {pipeline_mode = #tpu.pipeline_mode<synchronous>, transform_indices = @transform_8, window_bounds = array<i64: 1, 64>}, {pipeline_mode = #tpu.pipeline_mode<synchronous>, transform_indices = @transform_9, window_bounds = array<i64: 64, 256>}, {pipeline_mode = #tpu.pipeline_mode<synchronous>, transform_indices = @transform_10, window_bounds = array<i64: 128, 64>}, {pipeline_mode = #tpu.pipeline_mode<synchronous>, transform_indices = @transform_11, window_bounds = array<i64: 32, 64>}]} {
    %c0 = arith.constant 0 : index
    %c0_0 = arith.constant 0 : index
    %0 = vector.load %arg2[%c0, %c0_0] : memref<32x64xf32, #tpu.memory_space<vmem>>, vector<32x64xf32>
    %c0_1 = arith.constant 0 : index
    %c0_2 = arith.constant 0 : index
    %1 = vector.load %arg3[%c0_1, %c0_2] : memref<48x64xf32, #tpu.memory_space<vmem>>, vector<48x64xf32>
    %2 = tpu.concatenate %0, %1 in 0 : vector<32x64xf32>, vector<48x64xf32> -> vector<80x64xf32>
    %3 = arith.mulf %2, %2 : vector<80x64xf32>
    %cst = arith.constant dense<0.000000e+00> : vector<80xf32>
    %4 = vector.multi_reduction <add>, %3, %cst [1] : vector<80x64xf32> to vector<80xf32>
    %5 = vector.shape_cast %4 : vector<80xf32> to vector<80x1xf32>
    %cst_3 = arith.constant 6.400000e+01 : f32
    %6 = vector.broadcast %cst_3 : f32 to vector<80x1xf32>
    %7 = arith.divf %5, %6 : vector<80x1xf32>
    %cst_4 = arith.constant 9.99999997E-7 : f32
    %8 = vector.broadcast %cst_4 : f32 to vector<80x1xf32>
    %9 = arith.addf %7, %8 : vector<80x1xf32>
    %10 = math.rsqrt %9 : vector<80x1xf32>
    %11 = vector.broadcast %10 : vector<80x1xf32> to vector<80x64xf32>
    %12 = arith.mulf %2, %11 : vector<80x64xf32>
    %c0_5 = arith.constant 0 : index
    %c0_6 = arith.constant 0 : index
    %13 = vector.load %arg4[%c0_5, %c0_6] : memref<1x64xf32, #tpu.memory_space<vmem>>, vector<1x64xf32>
    %14 = vector.broadcast %13 : vector<1x64xf32> to vector<80x64xf32>
    %15 = arith.mulf %12, %14 : vector<80x64xf32>
    %16 = arith.truncf %15 : vector<80x64xf32> to vector<80x64xbf16>
    %c0_7 = arith.constant 0 : index
    %c0_8 = arith.constant 0 : index
    %17 = vector.load %arg5[%c0_7, %c0_8] : memref<64x128xbf16, #tpu.memory_space<vmem>>, vector<64x128xbf16>
    %cst_9 = arith.constant dense<0.000000e+00> : vector<80x128xf32>
    %18 = tpu.matmul %16, %17, %cst_9 {dimension_numbers = #tpu.dot_dimension_numbers<[1], [0], [0], [1], [0, 0, 1, 1], [], []>} : vector<80x64xbf16>, vector<64x128xbf16>, vector<80x128xf32> -> vector<80x128xf32>
    %c0_10 = arith.constant 0 : index
    %c0_11 = arith.constant 0 : index
    %19 = vector.load %arg6[%c0_10, %c0_11] : memref<16x128xf32, #tpu.memory_space<vmem>>, vector<8x128xf32>
    %c8 = arith.constant 8 : index
    %c0_12 = arith.constant 0 : index
    %20 = vector.load %arg6[%c8, %c0_12] : memref<16x128xf32, #tpu.memory_space<vmem>>, vector<8x128xf32>
    %21 = tpu.concatenate %19, %19, %19, %19, %20, %20, %20, %20, %20, %20 in 0 : vector<8x128xf32>, vector<8x128xf32>, vector<8x128xf32>, vector<8x128xf32>, vector<8x128xf32>, vector<8x128xf32>, vector<8x128xf32>, vector<8x128xf32>, vector<8x128xf32>, vector<8x128xf32> -> vector<80x128xf32>
    %c0_13 = arith.constant 0 : index
    %c0_14 = arith.constant 0 : index
    %22 = vector.load %arg7[%c0_13, %c0_14] : memref<16x128xf32, #tpu.memory_space<vmem>>, vector<8x128xf32>
    %c8_15 = arith.constant 8 : index
    %c0_16 = arith.constant 0 : index
    %23 = vector.load %arg7[%c8_15, %c0_16] : memref<16x128xf32, #tpu.memory_space<vmem>>, vector<8x128xf32>
    %24 = tpu.concatenate %22, %22, %22, %22, %23, %23, %23, %23, %23, %23 in 0 : vector<8x128xf32>, vector<8x128xf32>, vector<8x128xf32>, vector<8x128xf32>, vector<8x128xf32>, vector<8x128xf32>, vector<8x128xf32>, vector<8x128xf32>, vector<8x128xf32>, vector<8x128xf32> -> vector<80x128xf32>
    %25 = vector.extract_strided_slice %18 {offsets = [0, 0], sizes = [80, 16], strides = [1, 1]} : vector<80x128xf32> to vector<80x16xf32>
    %26 = vector.extract_strided_slice %18 {offsets = [0, 16], sizes = [80, 16], strides = [1, 1]} : vector<80x128xf32> to vector<80x16xf32>
    %cst_17 = arith.constant 0.000000e+00 : f32
    %27 = vector.broadcast %cst_17 : f32 to vector<80x16xf32>
    %28 = arith.subf %27, %26 : vector<80x16xf32>
    %29 = vector.extract_strided_slice %18 {offsets = [0, 32], sizes = [80, 16], strides = [1, 1]} : vector<80x128xf32> to vector<80x16xf32>
    %30 = vector.extract_strided_slice %18 {offsets = [0, 48], sizes = [80, 16], strides = [1, 1]} : vector<80x128xf32> to vector<80x16xf32>
    %cst_18 = arith.constant 0.000000e+00 : f32
    %31 = vector.broadcast %cst_18 : f32 to vector<80x16xf32>
    %32 = arith.subf %31, %30 : vector<80x16xf32>
    %33 = vector.extract_strided_slice %18 {offsets = [0, 64], sizes = [80, 16], strides = [1, 1]} : vector<80x128xf32> to vector<80x16xf32>
    %34 = vector.extract_strided_slice %18 {offsets = [0, 80], sizes = [80, 16], strides = [1, 1]} : vector<80x128xf32> to vector<80x16xf32>
    %cst_19 = arith.constant 0.000000e+00 : f32
    %35 = vector.broadcast %cst_19 : f32 to vector<80x16xf32>
    %36 = arith.subf %35, %34 : vector<80x16xf32>
    %37 = vector.extract_strided_slice %18 {offsets = [0, 96], sizes = [80, 32], strides = [1, 1]} : vector<80x128xf32> to vector<80x32xf32>
    %38 = tpu.concatenate %28, %25, %32, %29, %36, %33, %37 in 1 : vector<80x16xf32>, vector<80x16xf32>, vector<80x16xf32>, vector<80x16xf32>, vector<80x16xf32>, vector<80x16xf32>, vector<80x32xf32> -> vector<80x128xf32>
    %39 = arith.mulf %18, %21 : vector<80x128xf32>
    %40 = arith.mulf %38, %24 : vector<80x128xf32>
    %41 = arith.addf %39, %40 : vector<80x128xf32>
    %42 = vector.extract_strided_slice %41 {offsets = [0, 0], sizes = [32, 64], strides = [1, 1]} : vector<80x128xf32> to vector<32x64xf32>
    %43 = vector.extract_strided_slice %41 {offsets = [0, 64], sizes = [80, 64], strides = [1, 1]} : vector<80x128xf32> to vector<80x64xf32>
    %c0_20 = arith.constant 0 : index
    %c0_21 = arith.constant 0 : index
    %44 = vector.load %arg14[%c0_20, %c0_21] : memref<80x64xf32, #tpu.memory_space<vmem>>, vector<80x64xf32>
    tpu.vector_store %arg14[%c0_20, %c0_21], %43 {strides = array<i32>} : memref<80x64xf32, #tpu.memory_space<vmem>>, vector<80x64xf32>,
    %c0_22 = arith.constant 0 : index
    %45 = memref.load %arg1[%c0_22] : memref<16xi32, #tpu.memory_space<smem>>
    %c8_i32 = arith.constant 8 : i32
    %46 = arith.muli %45, %c8_i32 : i32
    %47 = tpu.assume_multiple %46, 8 : i32
    %c8_23 = arith.constant 8 : index
    %48 = memref.load %arg1[%c8_23] : memref<16xi32, #tpu.memory_space<smem>>
    %c8_i32_24 = arith.constant 8 : i32
    %49 = arith.muli %48, %c8_i32_24 : i32
    %c32_i32 = arith.constant 32 : i32
    %50 = arith.addi %c32_i32, %49 : i32
    %51 = tpu.assume_multiple %50, 8 : i32
    %52 = arith.index_cast %47 : i32 to index
    %c0_25 = arith.constant 0 : index
    %53 = vector.load %arg14[%52, %c0_25] : memref<80x64xf32, #tpu.memory_space<vmem>>, vector<8x64xf32>
    %c0_26 = arith.constant 0 : index
    %c0_27 = arith.constant 0 : index
    %54 = vector.load %arg15[%c0_26, %c0_27] : memref<128x64xf32, #tpu.memory_space<vmem>>, vector<8x64xf32>
    tpu.vector_store %arg15[%c0_26, %c0_27], %53 {strides = array<i32>} : memref<128x64xf32, #tpu.memory_space<vmem>>, vector<8x64xf32>,
    %55 = arith.index_cast %51 : i32 to index
    %c0_28 = arith.constant 0 : index
    %56 = vector.load %arg14[%55, %c0_28] : memref<80x64xf32, #tpu.memory_space<vmem>>, vector<8x64xf32>
    %c8_29 = arith.constant 8 : index
    %c0_30 = arith.constant 0 : index
    %57 = vector.load %arg15[%c8_29, %c0_30] : memref<128x64xf32, #tpu.memory_space<vmem>>, vector<8x64xf32>
    tpu.vector_store %arg15[%c8_29, %c0_30], %56 {strides = array<i32>} : memref<128x64xf32, #tpu.memory_space<vmem>>, vector<8x64xf32>,
    %c1 = arith.constant 1 : index
    %58 = memref.load %arg1[%c1] : memref<16xi32, #tpu.memory_space<smem>>
    %c8_i32_31 = arith.constant 8 : i32
    %59 = arith.muli %58, %c8_i32_31 : i32
    %60 = tpu.assume_multiple %59, 8 : i32
    %c9 = arith.constant 9 : index
    %61 = memref.load %arg1[%c9] : memref<16xi32, #tpu.memory_space<smem>>
    %c8_i32_32 = arith.constant 8 : i32
    %62 = arith.muli %61, %c8_i32_32 : i32
    %c32_i32_33 = arith.constant 32 : i32
    %63 = arith.addi %c32_i32_33, %62 : i32
    %64 = tpu.assume_multiple %63, 8 : i32
    %65 = arith.index_cast %60 : i32 to index
    %c0_34 = arith.constant 0 : index
    %66 = vector.load %arg14[%65, %c0_34] : memref<80x64xf32, #tpu.memory_space<vmem>>, vector<8x64xf32>
    %c16 = arith.constant 16 : index
    %c0_35 = arith.constant 0 : index
    %67 = vector.load %arg15[%c16, %c0_35] : memref<128x64xf32, #tpu.memory_space<vmem>>, vector<8x64xf32>
    tpu.vector_store %arg15[%c16, %c0_35], %66 {strides = array<i32>} : memref<128x64xf32, #tpu.memory_space<vmem>>, vector<8x64xf32>,
    %68 = arith.index_cast %64 : i32 to index
    %c0_36 = arith.constant 0 : index
    %69 = vector.load %arg14[%68, %c0_36] : memref<80x64xf32, #tpu.memory_space<vmem>>, vector<8x64xf32>
    %c24 = arith.constant 24 : index
    %c0_37 = arith.constant 0 : index
    %70 = vector.load %arg15[%c24, %c0_37] : memref<128x64xf32, #tpu.memory_space<vmem>>, vector<8x64xf32>
    tpu.vector_store %arg15[%c24, %c0_37], %69 {strides = array<i32>} : memref<128x64xf32, #tpu.memory_space<vmem>>, vector<8x64xf32>,
    %c2 = arith.constant 2 : index
    %71 = memref.load %arg1[%c2] : memref<16xi32, #tpu.memory_space<smem>>
    %c8_i32_38 = arith.constant 8 : i32
    %72 = arith.muli %71, %c8_i32_38 : i32
    %73 = tpu.assume_multiple %72, 8 : i32
    %c10 = arith.constant 10 : index
    %74 = memref.load %arg1[%c10] : memref<16xi32, #tpu.memory_space<smem>>
    %c8_i32_39 = arith.constant 8 : i32
    %75 = arith.muli %74, %c8_i32_39 : i32
    %c32_i32_40 = arith.constant 32 : i32
    %76 = arith.addi %c32_i32_40, %75 : i32
    %77 = tpu.assume_multiple %76, 8 : i32
    %78 = arith.index_cast %73 : i32 to index
    %c0_41 = arith.constant 0 : index
    %79 = vector.load %arg14[%78, %c0_41] : memref<80x64xf32, #tpu.memory_space<vmem>>, vector<8x64xf32>
    %c32 = arith.constant 32 : index
    %c0_42 = arith.constant 0 : index
    %80 = vector.load %arg15[%c32, %c0_42] : memref<128x64xf32, #tpu.memory_space<vmem>>, vector<8x64xf32>
    tpu.vector_store %arg15[%c32, %c0_42], %79 {strides = array<i32>} : memref<128x64xf32, #tpu.memory_space<vmem>>, vector<8x64xf32>,
    %81 = arith.index_cast %77 : i32 to index
    %c0_43 = arith.constant 0 : index
    %82 = vector.load %arg14[%81, %c0_43] : memref<80x64xf32, #tpu.memory_space<vmem>>, vector<8x64xf32>
    %c40 = arith.constant 40 : index
    %c0_44 = arith.constant 0 : index
    %83 = vector.load %arg15[%c40, %c0_44] : memref<128x64xf32, #tpu.memory_space<vmem>>, vector<8x64xf32>
    tpu.vector_store %arg15[%c40, %c0_44], %82 {strides = array<i32>} : memref<128x64xf32, #tpu.memory_space<vmem>>, vector<8x64xf32>,
    %c3 = arith.constant 3 : index
    %84 = memref.load %arg1[%c3] : memref<16xi32, #tpu.memory_space<smem>>
    %c8_i32_45 = arith.constant 8 : i32
    %85 = arith.muli %84, %c8_i32_45 : i32
    %86 = tpu.assume_multiple %85, 8 : i32
    %c11 = arith.constant 11 : index
    %87 = memref.load %arg1[%c11] : memref<16xi32, #tpu.memory_space<smem>>
    %c8_i32_46 = arith.constant 8 : i32
    %88 = arith.muli %87, %c8_i32_46 : i32
    %c32_i32_47 = arith.constant 32 : i32
    %89 = arith.addi %c32_i32_47, %88 : i32
    %90 = tpu.assume_multiple %89, 8 : i32
    %91 = arith.index_cast %86 : i32 to index
    %c0_48 = arith.constant 0 : index
    %92 = vector.load %arg14[%91, %c0_48] : memref<80x64xf32, #tpu.memory_space<vmem>>, vector<8x64xf32>
    %c48 = arith.constant 48 : index
    %c0_49 = arith.constant 0 : index
    %93 = vector.load %arg15[%c48, %c0_49] : memref<128x64xf32, #tpu.memory_space<vmem>>, vector<8x64xf32>
    tpu.vector_store %arg15[%c48, %c0_49], %92 {strides = array<i32>} : memref<128x64xf32, #tpu.memory_space<vmem>>, vector<8x64xf32>,
    %94 = arith.index_cast %90 : i32 to index
    %c0_50 = arith.constant 0 : index
    %95 = vector.load %arg14[%94, %c0_50] : memref<80x64xf32, #tpu.memory_space<vmem>>, vector<8x64xf32>
    %c56 = arith.constant 56 : index
    %c0_51 = arith.constant 0 : index
    %96 = vector.load %arg15[%c56, %c0_51] : memref<128x64xf32, #tpu.memory_space<vmem>>, vector<8x64xf32>
    tpu.vector_store %arg15[%c56, %c0_51], %95 {strides = array<i32>} : memref<128x64xf32, #tpu.memory_space<vmem>>, vector<8x64xf32>,
    %c4 = arith.constant 4 : index
    %97 = memref.load %arg1[%c4] : memref<16xi32, #tpu.memory_space<smem>>
    %c8_i32_52 = arith.constant 8 : i32
    %98 = arith.muli %97, %c8_i32_52 : i32
    %99 = tpu.assume_multiple %98, 8 : i32
    %c12 = arith.constant 12 : index
    %100 = memref.load %arg1[%c12] : memref<16xi32, #tpu.memory_space<smem>>
    %c8_i32_53 = arith.constant 8 : i32
    %101 = arith.muli %100, %c8_i32_53 : i32
    %c32_i32_54 = arith.constant 32 : i32
    %102 = arith.addi %c32_i32_54, %101 : i32
    %103 = tpu.assume_multiple %102, 8 : i32
    %104 = arith.index_cast %99 : i32 to index
    %c0_55 = arith.constant 0 : index
    %105 = vector.load %arg14[%104, %c0_55] : memref<80x64xf32, #tpu.memory_space<vmem>>, vector<8x64xf32>
    %c64 = arith.constant 64 : index
    %c0_56 = arith.constant 0 : index
    %106 = vector.load %arg15[%c64, %c0_56] : memref<128x64xf32, #tpu.memory_space<vmem>>, vector<8x64xf32>
    tpu.vector_store %arg15[%c64, %c0_56], %105 {strides = array<i32>} : memref<128x64xf32, #tpu.memory_space<vmem>>, vector<8x64xf32>,
    %107 = arith.index_cast %103 : i32 to index
    %c0_57 = arith.constant 0 : index
    %108 = vector.load %arg14[%107, %c0_57] : memref<80x64xf32, #tpu.memory_space<vmem>>, vector<8x64xf32>
    %c72 = arith.constant 72 : index
    %c0_58 = arith.constant 0 : index
    %109 = vector.load %arg15[%c72, %c0_58] : memref<128x64xf32, #tpu.memory_space<vmem>>, vector<8x64xf32>
    tpu.vector_store %arg15[%c72, %c0_58], %108 {strides = array<i32>} : memref<128x64xf32, #tpu.memory_space<vmem>>, vector<8x64xf32>,
    %c5 = arith.constant 5 : index
    %110 = memref.load %arg1[%c5] : memref<16xi32, #tpu.memory_space<smem>>
    %c8_i32_59 = arith.constant 8 : i32
    %111 = arith.muli %110, %c8_i32_59 : i32
    %112 = tpu.assume_multiple %111, 8 : i32
    %c13 = arith.constant 13 : index
    %113 = memref.load %arg1[%c13] : memref<16xi32, #tpu.memory_space<smem>>
    %c8_i32_60 = arith.constant 8 : i32
    %114 = arith.muli %113, %c8_i32_60 : i32
    %c32_i32_61 = arith.constant 32 : i32
    %115 = arith.addi %c32_i32_61, %114 : i32
    %116 = tpu.assume_multiple %115, 8 : i32
    %117 = arith.index_cast %112 : i32 to index
    %c0_62 = arith.constant 0 : index
    %118 = vector.load %arg14[%117, %c0_62] : memref<80x64xf32, #tpu.memory_space<vmem>>, vector<8x64xf32>
    %c80 = arith.constant 80 : index
    %c0_63 = arith.constant 0 : index
    %119 = vector.load %arg15[%c80, %c0_63] : memref<128x64xf32, #tpu.memory_space<vmem>>, vector<8x64xf32>
    tpu.vector_store %arg15[%c80, %c0_63], %118 {strides = array<i32>} : memref<128x64xf32, #tpu.memory_space<vmem>>, vector<8x64xf32>,
    %120 = arith.index_cast %116 : i32 to index
    %c0_64 = arith.constant 0 : index
    %121 = vector.load %arg14[%120, %c0_64] : memref<80x64xf32, #tpu.memory_space<vmem>>, vector<8x64xf32>
    %c88 = arith.constant 88 : index
    %c0_65 = arith.constant 0 : index
    %122 = vector.load %arg15[%c88, %c0_65] : memref<128x64xf32, #tpu.memory_space<vmem>>, vector<8x64xf32>
    tpu.vector_store %arg15[%c88, %c0_65], %121 {strides = array<i32>} : memref<128x64xf32, #tpu.memory_space<vmem>>, vector<8x64xf32>,
    %c6 = arith.constant 6 : index
    %123 = memref.load %arg1[%c6] : memref<16xi32, #tpu.memory_space<smem>>
    %c8_i32_66 = arith.constant 8 : i32
    %124 = arith.muli %123, %c8_i32_66 : i32
    %125 = tpu.assume_multiple %124, 8 : i32
    %c14 = arith.constant 14 : index
    %126 = memref.load %arg1[%c14] : memref<16xi32, #tpu.memory_space<smem>>
    %c8_i32_67 = arith.constant 8 : i32
    %127 = arith.muli %126, %c8_i32_67 : i32
    %c32_i32_68 = arith.constant 32 : i32
    %128 = arith.addi %c32_i32_68, %127 : i32
    %129 = tpu.assume_multiple %128, 8 : i32
    %130 = arith.index_cast %125 : i32 to index
    %c0_69 = arith.constant 0 : index
    %131 = vector.load %arg14[%130, %c0_69] : memref<80x64xf32, #tpu.memory_space<vmem>>, vector<8x64xf32>
    %c96 = arith.constant 96 : index
    %c0_70 = arith.constant 0 : index
    %132 = vector.load %arg15[%c96, %c0_70] : memref<128x64xf32, #tpu.memory_space<vmem>>, vector<8x64xf32>
    tpu.vector_store %arg15[%c96, %c0_70], %131 {strides = array<i32>} : memref<128x64xf32, #tpu.memory_space<vmem>>, vector<8x64xf32>,
    %133 = arith.index_cast %129 : i32 to index
    %c0_71 = arith.constant 0 : index
    %134 = vector.load %arg14[%133, %c0_71] : memref<80x64xf32, #tpu.memory_space<vmem>>, vector<8x64xf32>
    %c104 = arith.constant 104 : index
    %c0_72 = arith.constant 0 : index
    %135 = vector.load %arg15[%c104, %c0_72] : memref<128x64xf32, #tpu.memory_space<vmem>>, vector<8x64xf32>
    tpu.vector_store %arg15[%c104, %c0_72], %134 {strides = array<i32>} : memref<128x64xf32, #tpu.memory_space<vmem>>, vector<8x64xf32>,
    %c7 = arith.constant 7 : index
    %136 = memref.load %arg1[%c7] : memref<16xi32, #tpu.memory_space<smem>>
    %c8_i32_73 = arith.constant 8 : i32
    %137 = arith.muli %136, %c8_i32_73 : i32
    %138 = tpu.assume_multiple %137, 8 : i32
    %c15 = arith.constant 15 : index
    %139 = memref.load %arg1[%c15] : memref<16xi32, #tpu.memory_space<smem>>
    %c8_i32_74 = arith.constant 8 : i32
    %140 = arith.muli %139, %c8_i32_74 : i32
    %c32_i32_75 = arith.constant 32 : i32
    %141 = arith.addi %c32_i32_75, %140 : i32
    %142 = tpu.assume_multiple %141, 8 : i32
    %143 = arith.index_cast %138 : i32 to index
    %c0_76 = arith.constant 0 : index
    %144 = vector.load %arg14[%143, %c0_76] : memref<80x64xf32, #tpu.memory_space<vmem>>, vector<8x64xf32>
    %c112 = arith.constant 112 : index
    %c0_77 = arith.constant 0 : index
    %145 = vector.load %arg15[%c112, %c0_77] : memref<128x64xf32, #tpu.memory_space<vmem>>, vector<8x64xf32>
    tpu.vector_store %arg15[%c112, %c0_77], %144 {strides = array<i32>} : memref<128x64xf32, #tpu.memory_space<vmem>>, vector<8x64xf32>,
    %146 = arith.index_cast %142 : i32 to index
    %c0_78 = arith.constant 0 : index
    %147 = vector.load %arg14[%146, %c0_78] : memref<80x64xf32, #tpu.memory_space<vmem>>, vector<8x64xf32>
    %c120 = arith.constant 120 : index
    %c0_79 = arith.constant 0 : index
    %148 = vector.load %arg15[%c120, %c0_79] : memref<128x64xf32, #tpu.memory_space<vmem>>, vector<8x64xf32>
    tpu.vector_store %arg15[%c120, %c0_79], %147 {strides = array<i32>} : memref<128x64xf32, #tpu.memory_space<vmem>>, vector<8x64xf32>,
    %c0_80 = arith.constant 0 : index
    %c0_81 = arith.constant 0 : index
    %149 = vector.load %arg15[%c0_80, %c0_81] : memref<128x64xf32, #tpu.memory_space<vmem>>, vector<128x64xf32>
    %cst_82 = arith.constant 0.000000e+00 : f32
    %150 = vector.broadcast %cst_82 : f32 to vector<32x64xf32>
    %151 = vector.extract_strided_slice %149 {offsets = [0, 0], sizes = [128, 32], strides = [1, 1]} : vector<128x64xf32> to vector<128x32xf32>
    %152 = arith.truncf %151 : vector<128x32xf32> to vector<128x32xbf16>
    %153 = vector.extract_strided_slice %149 {offsets = [0, 32], sizes = [128, 32], strides = [1, 1]} : vector<128x64xf32> to vector<128x32xf32>
    %154 = arith.truncf %153 : vector<128x32xf32> to vector<128x32xbf16>
    %155 = vector.extract_strided_slice %42 {offsets = [0, 0], sizes = [32, 32], strides = [1, 1]} : vector<32x64xf32> to vector<32x32xf32>
    %156 = vector.extract_strided_slice %42 {offsets = [0, 32], sizes = [32, 32], strides = [1, 1]} : vector<32x64xf32> to vector<32x32xf32>
    %157 = tpu.concatenate %155, %156 in 0 : vector<32x32xf32>, vector<32x32xf32> -> vector<64x32xf32>
    %158 = arith.truncf %157 : vector<64x32xf32> to vector<64x32xbf16>
    %cst_83 = arith.constant dense<0.000000e+00> : vector<64x128xf32>
    %159 = tpu.matmul %158, %152, %cst_83 {dimension_numbers = #tpu.dot_dimension_numbers<[1], [1], [0], [0], [0, 0, 1, 0], [], []>} : vector<64x32xbf16>, vector<128x32xbf16>, vector<64x128xf32> -> vector<64x128xf32>
    %c0_84 = arith.constant 0 : index
    %c0_85 = arith.constant 0 : index
    %160 = vector.load %arg8[%c0_84, %c0_85] : memref<64x128xf32, #tpu.memory_space<vmem>>, vector<64x128xf32>
    %161 = arith.addf %159, %160 : vector<64x128xf32>
    %cst_86 = arith.constant dense<0xFF800000> : vector<64xf32>
    %162 = vector.multi_reduction <maximumf>, %161, %cst_86 [1] : vector<64x128xf32> to vector<64xf32>
    %163 = vector.shape_cast %162 : vector<64xf32> to vector<64x1xf32>
    %cst_87 = arith.constant 0.000000e+00 : f32
    %164 = vector.broadcast %cst_87 : f32 to vector<64x1xf32>
    %165 = arith.maximumf %163, %164 : vector<64x1xf32>
    %166 = vector.broadcast %165 : vector<64x1xf32> to vector<64x128xf32>
    %167 = arith.subf %161, %166 : vector<64x128xf32>
    %168 = math.exp %167 : vector<64x128xf32>
    %cst_88 = arith.constant dense<0.000000e+00> : vector<64xf32>
    %169 = vector.multi_reduction <add>, %168, %cst_88 [1] : vector<64x128xf32> to vector<64xf32>
    %170 = vector.shape_cast %169 : vector<64xf32> to vector<64x1xf32>
    %cst_89 = arith.constant 1.000000e-16 : f32
    %171 = vector.broadcast %cst_89 : f32 to vector<64x1xf32>
    %172 = arith.addf %170, %171 : vector<64x1xf32>
    %173 = tpu.reciprocal %172 {approx = true} : vector<64x1xf32> -> vector<64x1xf32>
    %174 = vector.broadcast %173 : vector<64x1xf32> to vector<64x128xf32>
    %175 = arith.mulf %168, %174 : vector<64x128xf32>
    %176 = arith.truncf %175 : vector<64x128xf32> to vector<64x128xbf16>
    %cst_90 = arith.constant dense<0.000000e+00> : vector<64x32xf32>
    %177 = tpu.matmul %176, %154, %cst_90 {dimension_numbers = #tpu.dot_dimension_numbers<[1], [0], [0], [1], [0, 0, 1, 1], [], []>} : vector<64x128xbf16>, vector<128x32xbf16>, vector<64x32xf32> -> vector<64x32xf32>
    %178 = vector.extract_strided_slice %177 {offsets = [0, 0], sizes = [32, 32], strides = [1, 1]} : vector<64x32xf32> to vector<32x32xf32>
    %179 = arith.truncf %178 : vector<32x32xf32> to vector<32x32xbf16>
    %c0_91 = arith.constant 0 : index
    %c0_92 = arith.constant 0 : index
    %180 = vector.load %arg9[%c0_91, %c0_92] : memref<64x64xbf16, #tpu.memory_space<vmem>>, vector<32x64xbf16>
    %cst_93 = arith.constant dense<0.000000e+00> : vector<32x64xf32>
    %181 = tpu.matmul %179, %180, %cst_93 {dimension_numbers = #tpu.dot_dimension_numbers<[1], [0], [0], [1], [0, 0, 1, 1], [], []>} : vector<32x32xbf16>, vector<32x64xbf16>, vector<32x64xf32> -> vector<32x64xf32>
    %182 = arith.addf %150, %181 : vector<32x64xf32>
    %183 = vector.extract_strided_slice %177 {offsets = [32, 0], sizes = [32, 32], strides = [1, 1]} : vector<64x32xf32> to vector<32x32xf32>
    %184 = arith.truncf %183 : vector<32x32xf32> to vector<32x32xbf16>
    %c32_94 = arith.constant 32 : index
    %c0_95 = arith.constant 0 : index
    %185 = vector.load %arg9[%c32_94, %c0_95] : memref<64x64xbf16, #tpu.memory_space<vmem>>, vector<32x64xbf16>
    %cst_96 = arith.constant dense<0.000000e+00> : vector<32x64xf32>
    %186 = tpu.matmul %184, %185, %cst_96 {dimension_numbers = #tpu.dot_dimension_numbers<[1], [0], [0], [1], [0, 0, 1, 1], [], []>} : vector<32x32xbf16>, vector<32x64xbf16>, vector<32x64xf32> -> vector<32x64xf32>
    %187 = arith.addf %182, %186 : vector<32x64xf32>
    %c0_97 = arith.constant 0 : index
    %c0_98 = arith.constant 0 : index
    %188 = vector.load %arg2[%c0_97, %c0_98] : memref<32x64xf32, #tpu.memory_space<vmem>>, vector<32x64xf32>
    %189 = arith.addf %188, %187 : vector<32x64xf32>
    %190 = arith.mulf %189, %189 : vector<32x64xf32>
    %cst_99 = arith.constant dense<0.000000e+00> : vector<32xf32>
    %191 = vector.multi_reduction <add>, %190, %cst_99 [1] : vector<32x64xf32> to vector<32xf32>
    %192 = vector.shape_cast %191 : vector<32xf32> to vector<32x1xf32>
    %cst_100 = arith.constant 6.400000e+01 : f32
    %193 = vector.broadcast %cst_100 : f32 to vector<32x1xf32>
    %194 = arith.divf %192, %193 : vector<32x1xf32>
    %cst_101 = arith.constant 9.99999997E-7 : f32
    %195 = vector.broadcast %cst_101 : f32 to vector<32x1xf32>
    %196 = arith.addf %194, %195 : vector<32x1xf32>
    %197 = math.rsqrt %196 : vector<32x1xf32>
    %198 = vector.broadcast %197 : vector<32x1xf32> to vector<32x64xf32>
    %199 = arith.mulf %189, %198 : vector<32x64xf32>
    %c0_102 = arith.constant 0 : index
    %c0_103 = arith.constant 0 : index
    %200 = vector.load %arg10[%c0_102, %c0_103] : memref<1x64xf32, #tpu.memory_space<vmem>>, vector<1x64xf32>
    %201 = vector.broadcast %200 : vector<1x64xf32> to vector<32x64xf32>
    %202 = arith.mulf %199, %201 : vector<32x64xf32>
    %203 = arith.truncf %202 : vector<32x64xf32> to vector<32x64xbf16>
    %c0_104 = arith.constant 0 : index
    %c0_105 = arith.constant 0 : index
    %204 = vector.load %arg11[%c0_104, %c0_105] : memref<64x256xbf16, #tpu.memory_space<vmem>>, vector<64x256xbf16>
    %cst_106 = arith.constant dense<0.000000e+00> : vector<32x256xf32>
    %205 = tpu.matmul %203, %204, %cst_106 {dimension_numbers = #tpu.dot_dimension_numbers<[1], [0], [0], [1], [0, 0, 1, 1], [], []>} : vector<32x64xbf16>, vector<64x256xbf16>, vector<32x256xf32> -> vector<32x256xf32>
    %206 = vector.extract_strided_slice %205 {offsets = [0, 0], sizes = [32, 128], strides = [1, 1]} : vector<32x256xf32> to vector<32x128xf32>
    %207 = arith.negf %206 : vector<32x128xf32>
    %208 = math.exp %207 : vector<32x128xf32>
    %cst_107 = arith.constant 1.000000e+00 : f32
    %209 = vector.broadcast %cst_107 : f32 to vector<32x128xf32>
    %210 = arith.addf %209, %208 : vector<32x128xf32>
    %211 = arith.divf %209, %210 : vector<32x128xf32>
    %212 = arith.mulf %206, %211 : vector<32x128xf32>
    %213 = vector.extract_strided_slice %205 {offsets = [0, 128], sizes = [32, 128], strides = [1, 1]} : vector<32x256xf32> to vector<32x128xf32>
    %214 = arith.mulf %212, %213 : vector<32x128xf32>
    %215 = arith.truncf %214 : vector<32x128xf32> to vector<32x128xbf16>
    %c0_108 = arith.constant 0 : index
    %c0_109 = arith.constant 0 : index
    %216 = vector.load %arg12[%c0_108, %c0_109] : memref<128x64xbf16, #tpu.memory_space<vmem>>, vector<128x64xbf16>
    %cst_110 = arith.constant dense<0.000000e+00> : vector<32x64xf32>
    %217 = tpu.matmul %215, %216, %cst_110 {dimension_numbers = #tpu.dot_dimension_numbers<[1], [0], [0], [1], [0, 0, 1, 1], [], []>} : vector<32x128xbf16>, vector<128x64xbf16>, vector<32x64xf32> -> vector<32x64xf32>
    %218 = arith.addf %189, %217 : vector<32x64xf32>
    %c0_111 = arith.constant 0 : index
    %c0_112 = arith.constant 0 : index
    %219 = vector.load %arg13[%c0_111, %c0_112] : memref<32x64xf32, #tpu.memory_space<vmem>>, vector<32x64xf32>
    tpu.vector_store %arg13[%c0_111, %c0_112], %218 {strides = array<i32>} : memref<32x64xf32, #tpu.memory_space<vmem>>, vector<32x64xf32>,
    return
  }
  func.func @transform_0(%arg0: i32, %arg1: memref<16xi32, #tpu.memory_space<smem>>) -> (i32, i32) {
    %c0_i32 = arith.constant 0 : i32
    %c0_i32_0 = arith.constant 0 : i32
    %c0_i32_1 = arith.constant 0 : i32
    return %c0_i32, %c0_i32_0 : i32, i32
  }
  func.func @transform_1(%arg0: i32, %arg1: memref<16xi32, #tpu.memory_space<smem>>) -> (i32, i32) {
    %c0_i32 = arith.constant 0 : i32
    %c0_i32_0 = arith.constant 0 : i32
    %c0_i32_1 = arith.constant 0 : i32
    return %c0_i32, %c0_i32_0 : i32, i32
  }
  func.func @transform_2(%arg0: i32, %arg1: memref<16xi32, #tpu.memory_space<smem>>) -> (i32, i32) {
    %c0_i32 = arith.constant 0 : i32
    %c0_i32_0 = arith.constant 0 : i32
    %c0_i32_1 = arith.constant 0 : i32
    return %c0_i32, %c0_i32_0 : i32, i32
  }
  func.func @transform_3(%arg0: i32, %arg1: memref<16xi32, #tpu.memory_space<smem>>) -> (i32, i32) {
    %c0_i32 = arith.constant 0 : i32
    %c0_i32_0 = arith.constant 0 : i32
    %c0_i32_1 = arith.constant 0 : i32
    return %c0_i32, %c0_i32_0 : i32, i32
  }
  func.func @transform_4(%arg0: i32, %arg1: memref<16xi32, #tpu.memory_space<smem>>) -> (i32, i32) {
    %c0_i32 = arith.constant 0 : i32
    %c0_i32_0 = arith.constant 0 : i32
    %c0_i32_1 = arith.constant 0 : i32
    return %c0_i32, %c0_i32_0 : i32, i32
  }
  func.func @transform_5(%arg0: i32, %arg1: memref<16xi32, #tpu.memory_space<smem>>) -> (i32, i32) {
    %c0_i32 = arith.constant 0 : i32
    %c0_i32_0 = arith.constant 0 : i32
    %c0_i32_1 = arith.constant 0 : i32
    return %c0_i32, %c0_i32_0 : i32, i32
  }
  func.func @transform_6(%arg0: i32, %arg1: memref<16xi32, #tpu.memory_space<smem>>) -> (i32, i32) {
    %c0_i32 = arith.constant 0 : i32
    %c0_i32_0 = arith.constant 0 : i32
    %c0_i32_1 = arith.constant 0 : i32
    return %c0_i32, %c0_i32_0 : i32, i32
  }
  func.func @transform_7(%arg0: i32, %arg1: memref<16xi32, #tpu.memory_space<smem>>) -> (i32, i32) {
    %c0_i32 = arith.constant 0 : i32
    %c0_i32_0 = arith.constant 0 : i32
    %c0_i32_1 = arith.constant 0 : i32
    return %c0_i32, %c0_i32_0 : i32, i32
  }
  func.func @transform_8(%arg0: i32, %arg1: memref<16xi32, #tpu.memory_space<smem>>) -> (i32, i32) {
    %c0_i32 = arith.constant 0 : i32
    %c0_i32_0 = arith.constant 0 : i32
    %c0_i32_1 = arith.constant 0 : i32
    return %c0_i32, %c0_i32_0 : i32, i32
  }
  func.func @transform_9(%arg0: i32, %arg1: memref<16xi32, #tpu.memory_space<smem>>) -> (i32, i32) {
    %c0_i32 = arith.constant 0 : i32
    %c0_i32_0 = arith.constant 0 : i32
    %c0_i32_1 = arith.constant 0 : i32
    return %c0_i32, %c0_i32_0 : i32, i32
  }
  func.func @transform_10(%arg0: i32, %arg1: memref<16xi32, #tpu.memory_space<smem>>) -> (i32, i32) {
    %c0_i32 = arith.constant 0 : i32
    %c0_i32_0 = arith.constant 0 : i32
    %c0_i32_1 = arith.constant 0 : i32
    return %c0_i32, %c0_i32_0 : i32, i32
  }
  func.func @transform_11(%arg0: i32, %arg1: memref<16xi32, #tpu.memory_space<smem>>) -> (i32, i32) {
    %c0_i32 = arith.constant 0 : i32
    %c0_i32_0 = arith.constant 0 : i32
    %c0_i32_1 = arith.constant 0 : i32
    return %c0_i32, %c0_i32_0 : i32, i32
  }
}

</mosaic_0001>

<llo_original>
// kernel: tpu_custom_call.1
$region0: #{tpu_custom_call.1}
  #allocation0 [shape = 'u32[]', space=smem, size = 0x4, offset = 0x4, fixed_abs, tag = 'smem constant byte address 0x4 - core index']
  #allocation1 [shape = 'u32[72,128]{1,0:T(1,128)}', space=vmem, size = 0x9000, scoped, tag = 'internal scratch']
  #allocation2 [shape = 'f32[80,64]{1,0:T(8,128)}', space=vmem, size = 0xa000, scoped, tag = 'scratch operand']
  #allocation3 [shape = 'f32[128,64]{1,0:T(8,128)}', space=vmem, size = 0x10000, scoped, tag = 'scratch operand']
  #allocation4 [shape = 's32[1]{0}', space=sflag, size = 0x4, scoped, tag = 'scoped memory for tpu_custom_call.1']
  #allocation5 [shape = 'u8[512]{0}', space=smem, size = 0x200, scoped, tag = 'prefetched SMEM operand 0']
  %s0 = inlined_call_operand.vmem [shape: s32[16], index: 0, kind: input, shape index: {}]
  %s1 = inlined_call_operand.vmem [shape: f32[32,64], index: 1, kind: input, shape index: {}]
  %s2 = inlined_call_operand.hbm [shape: f32[48,64], index: 2, kind: input, shape index: {}]
  %s3 = inlined_call_operand.vmem [shape: f32[1,64], index: 3, kind: input, shape index: {}]
  %s4 = inlined_call_operand.hbm [shape: bf16[64,128], index: 4, kind: input, shape index: {}]
  %s5 = inlined_call_operand.hbm [shape: f32[16,128], index: 5, kind: input, shape index: {}]
  %s6 = inlined_call_operand.hbm [shape: f32[16,128], index: 6, kind: input, shape index: {}]
  %s7 = inlined_call_operand.vmem [shape: f32[64,128], index: 7, kind: input, shape index: {}]
  %s8 = inlined_call_operand.hbm [shape: bf16[64,64], index: 8, kind: input, shape index: {}]
  %s9 = inlined_call_operand.vmem [shape: f32[1,64], index: 9, kind: input, shape index: {}]
  %s10 = inlined_call_operand.hbm [shape: bf16[64,256], index: 10, kind: input, shape index: {}]
  %s11 = inlined_call_operand.vmem [shape: bf16[128,64], index: 11, kind: input, shape index: {}]
  %s12 = inlined_call_operand.hbm [shape: f32[32,64], index: 12, kind: output, shape index: {}]
  %s13 = sld [smem:[#allocation0]]
  $region78: #{tpu_custom_call.1} parent=0
    _
  %s15 = ssub.s32 1, %s13
  %s16 = scalar_select 0, %s15, %s13
  %s18 = sshll.u32 %s0, 4
  %s19 = int_to_ptr.vmem [resolvable:$true] %s18
  %21 = dma.vmem_to_smem %s19, 16, [#allocation5], [#allocation4]
  %23 = dma.done [#allocation4], 16
  %24 = sfence
  $region1: #{tpu_custom_call.1} parent=0
    #allocation6 [shape = 'u8[24576]{0}', space=vmem, size = 0x6000, scoped, tag = 'input window, operand 2, single buffered']
    #allocation7 [shape = 's32[1]{0}', space=sflag, size = 0x4, scoped, tag = 'scoped memory for tpu_custom_call.1']
    #allocation8 [shape = 's32[1]{0}', space=sflag, size = 0x4, scoped, tag = 'scoped memory for tpu_custom_call.1']
    #allocation9 [shape = 'u8[16384]{0}', space=vmem, size = 0x4000, scoped, tag = 'input window, operand 4, single buffered']
    #allocation10 [shape = 's32[1]{0}', space=sflag, size = 0x4, scoped, tag = 'scoped memory for tpu_custom_call.1']
    #allocation11 [shape = 'u8[8192]{0}', space=vmem, size = 0x2000, scoped, tag = 'input window, operand 5, single buffered']
    #allocation12 [shape = 'u8[8192]{0}', space=vmem, size = 0x2000, scoped, tag = 'input window, operand 6, single buffered']
    #allocation13 [shape = 's32[1]{0}', space=sflag, size = 0x4, scoped, tag = 'scoped memory for tpu_custom_call.1']
    #allocation14 [shape = 'u8[16384]{0}', space=vmem, size = 0x4000, scoped, tag = 'input window, operand 8, single buffered']
    #allocation15 [shape = 'u8[32768]{0}', space=vmem, size = 0x8000, scoped, tag = 'input window, operand 10, single buffered']
    #allocation16 [shape = 's32[1]{0}', space=sflag, size = 0x4, scoped, tag = 'scoped memory for tpu_custom_call.1']
    #allocation17 [shape = 'u8[16384]{0}', space=vmem, size = 0x4000, scoped, tag = 'output window, operand 0, single buffered']
    %25 = vsyncpa [#allocation7], 0
    %26 = vsyncpa [#allocation10], 0
    %27 = vsyncpa [#allocation13], 0
    %28 = vsyncpa [#allocation16], 0
    %29 = vsyncpa [#allocation8], 0
    // Predicated region
    $region2: #{tpu_custom_call.1} parent=1 // pred_check
      _
    $region3: #{tpu_custom_call.1} parent=1 // pred_check_branch
      %31 = sbr.rel (0) target = $region5
    $region4: #{tpu_custom_call.1} parent=1 // pred_region
      _
    $region5: #{tpu_custom_call.1} parent=1 // pred_fallthru
      _
    // Predicated region
    $region6: #{tpu_custom_call.1} parent=1 // pred_check
      _
    $region7: #{tpu_custom_call.1} parent=1 // pred_check_branch
      %33 = sbr.rel (0) target = $region9
    $region8: #{tpu_custom_call.1} parent=1 // pred_region
      %35 = vsyncadd [#allocation7], 0
      %s36 = sshll.u32 %s2, 4
      %s37 = int_to_ptr.hbm [resolvable:$true] %s36
      %s38 = sshll.u32 [#allocation6], 4
      %s39 = int_to_ptr.vmem [resolvable:$true] %s38
      %44 = dma.hbm_to_vmem [thread:$0]  %s37, 768, %s39, [#allocation7], 128, 128, 8
    $region9: #{tpu_custom_call.1} parent=1 // pred_fallthru
      _
    // Predicated region
    $region10: #{tpu_custom_call.1} parent=1 // pred_check
      _
    $region11: #{tpu_custom_call.1} parent=1 // pred_check_branch
      %46 = sbr.rel (0) target = $region13
    $region12: #{tpu_custom_call.1} parent=1 // pred_region
      _
    $region13: #{tpu_custom_call.1} parent=1 // pred_fallthru
      _
    // Predicated region
    $region14: #{tpu_custom_call.1} parent=1 // pred_check
      _
    $region15: #{tpu_custom_call.1} parent=1 // pred_check_branch
      %48 = sbr.rel (0) target = $region17
    $region16: #{tpu_custom_call.1} parent=1 // pred_region
      %50 = vsyncadd [#allocation10], 0
      %s51 = sshll.u32 %s4, 4
      %s52 = int_to_ptr.hbm [resolvable:$true] %s51
      %s53 = sshll.u32 [#allocation9], 4
      %s54 = int_to_ptr.vmem [resolvable:$true] %s53
      %59 = dma.hbm_to_vmem [thread:$0]  %s52, 512, %s54, [#allocation10], 64, 64, 4
    $region17: #{tpu_custom_call.1} parent=1 // pred_fallthru
      _
    // Predicated region
    $region18: #{tpu_custom_call.1} parent=1 // pred_check
      _
    $region19: #{tpu_custom_call.1} parent=1 // pred_check_branch
      %61 = sbr.rel (0) target = $region21
    $region20: #{tpu_custom_call.1} parent=1 // pred_region
      %63 = vsyncadd [#allocation10], 0
      %s64 = sshll.u32 %s5, 4
      %s65 = int_to_ptr.hbm [resolvable:$true] %s64
      %s66 = sshll.u32 [#allocation11], 4
      %s67 = int_to_ptr.vmem [resolvable:$true] %s66
      %72 = dma.hbm_to_vmem [thread:$0]  %s65, 256, %s67, [#allocation10], 128, 128, 8
    $region21: #{tpu_custom_call.1} parent=1 // pred_fallthru
      _
    // Predicated region
    $region22: #{tpu_custom_call.1} parent=1 // pred_check
      _
    $region23: #{tpu_custom_call.1} parent=1 // pred_check_branch
      %74 = sbr.rel (0) target = $region25
    $region24: #{tpu_custom_call.1} parent=1 // pred_region
      %76 = vsyncadd [#allocation13], 0
      %s77 = sshll.u32 %s6, 4
      %s78 = int_to_ptr.hbm [resolvable:$true] %s77
      %s79 = sshll.u32 [#allocation12], 4
      %s80 = int_to_ptr.vmem [resolvable:$true] %s79
      %85 = dma.hbm_to_vmem [thread:$0]  %s78, 256, %s80, [#allocation13], 128, 128, 8
    $region25: #{tpu_custom_call.1} parent=1 // pred_fallthru
      _
    // Predicated region
    $region26: #{tpu_custom_call.1} parent=1 // pred_check
      _
    $region27: #{tpu_custom_call.1} parent=1 // pred_check_branch
      %87 = sbr.rel (0) target = $region29
    $region28: #{tpu_custom_call.1} parent=1 // pred_region
      _
    $region29: #{tpu_custom_call.1} parent=1 // pred_fallthru
      _
    // Predicated region
    $region30: #{tpu_custom_call.1} parent=1 // pred_check
      _
    $region31: #{tpu_custom_call.1} parent=1 // pred_check_branch
      %89 = sbr.rel (0) target = $region33
    $region32: #{tpu_custom_call.1} parent=1 // pred_region
      %91 = vsyncadd [#allocation13], 0
      %s92 = sshll.u32 %s8, 4
      %s93 = int_to_ptr.hbm [resolvable:$true] %s92
      %s94 = sshll.u32 [#allocation14], 4
      %s95 = int_to_ptr.vmem [resolvable:$true] %s94
      %100 = dma.hbm_to_vmem [thread:$0]  %s93, 512, %s95, [#allocation13], 64, 64, 4
    $region33: #{tpu_custom_call.1} parent=1 // pred_fallthru
      _
    // Predicated region
    $region34: #{tpu_custom_call.1} parent=1 // pred_check
      _
    $region35: #{tpu_custom_call.1} parent=1 // pred_check_branch
      %102 = sbr.rel (0) target = $region37
    $region36: #{tpu_custom_call.1} parent=1 // pred_region
      _
    $region37: #{tpu_custom_call.1} parent=1 // pred_fallthru
      _
    // Predicated region
    $region38: #{tpu_custom_call.1} parent=1 // pred_check
      _
    $region39: #{tpu_custom_call.1} parent=1 // pred_check_branch
      %104 = sbr.rel (0) target = $region41
    $region40: #{tpu_custom_call.1} parent=1 // pred_region
      %106 = vsyncadd [#allocation16], 0
      %s107 = sshll.u32 %s10, 4
      %s108 = int_to_ptr.hbm [resolvable:$true] %s107
      %s109 = sshll.u32 [#allocation15], 4
      %s110 = int_to_ptr.vmem [resolvable:$true] %s109
      %115 = dma.hbm_to_vmem [thread:$0]  %s108, 1024, %s110, [#allocation16], 128, 128, 8
    $region41: #{tpu_custom_call.1} parent=1 // pred_fallthru
      _
    // Predicated region
    $region42: #{tpu_custom_call.1} parent=1 // pred_check
      _
    $region43: #{tpu_custom_call.1} parent=1 // pred_check_branch
      %117 = sbr.rel (0) target = $region45
    $region44: #{tpu_custom_call.1} parent=1 // pred_region
      _
    $region45: #{tpu_custom_call.1} parent=1 // pred_fallthru
      _
    // Predicated region
    $region46: #{tpu_custom_call.1} parent=1 // pred_check
      _
    $region47: #{tpu_custom_call.1} parent=1 // pred_check_branch
      %119 = sbr.rel (0) target = $region49
    $region48: #{tpu_custom_call.1} parent=1 // pred_region
      %121 = dma.done [#allocation7], 768
    $region49: #{tpu_custom_call.1} parent=1 // pred_fallthru
      _
    // Predicated region
    $region50: #{tpu_custom_call.1} parent=1 // pred_check
      _
    $region51: #{tpu_custom_call.1} parent=1 // pred_check_branch
      %123 = sbr.rel (0) target = $region53
    $region52: #{tpu_custom_call.1} parent=1 // pred_region
      %125 = dma.done [#allocation10], 512
    $region53: #{tpu_custom_call.1} parent=1 // pred_fallthru
      _
    // Predicated region
    $region54: #{tpu_custom_call.1} parent=1 // pred_check
      _
    $region55: #{tpu_custom_call.1} parent=1 // pred_check_branch
      %127 = sbr.rel (0) target = $region57
    $region56: #{tpu_custom_call.1} parent=1 // pred_region
      %129 = dma.done [#allocation10], 256
    $region57: #{tpu_custom_call.1} parent=1 // pred_fallthru
      _
    // Predicated region
    $region58: #{tpu_custom_call.1} parent=1 // pred_check
      _
    $region59: #{tpu_custom_call.1} parent=1 // pred_check_branch
      %131 = sbr.rel (0) target = $region61
    $region60: #{tpu_custom_call.1} parent=1 // pred_region
      %133 = dma.done [#allocation13], 256
    $region61: #{tpu_custom_call.1} parent=1 // pred_fallthru
      _
    // Predicated region
    $region62: #{tpu_custom_call.1} parent=1 // pred_check
      _
    $region63: #{tpu_custom_call.1} parent=1 // pred_check_branch
      %135 = sbr.rel (0) target = $region65
    $region64: #{tpu_custom_call.1} parent=1 // pred_region
      %137 = dma.done [#allocation13], 512
    $region65: #{tpu_custom_call.1} parent=1 // pred_fallthru
      _
    // Predicated region
    $region66: #{tpu_custom_call.1} parent=1 // pred_check
      _
    $region67: #{tpu_custom_call.1} parent=1 // pred_check_branch
      %139 = sbr.rel (0) target = $region69
    $region68: #{tpu_custom_call.1} parent=1 // pred_region
      %141 = dma.done [#allocation16], 1024
    $region69: #{tpu_custom_call.1} parent=1 // pred_fallthru
      _
    %v143 = vld [vmem:[%s1] sm:$0xff]
    %v144 = vld [vmem:[%s1 + $0x8] sm:$0xff]
    %v145 = vld [vmem:[%s1 + $0x10] sm:$0xff]
    %v146 = vld [vmem:[%s1 + $0x18] sm:$0xff]
    %v147 = vld [vmem:[#allocation6] sm:$0xff]
    %v148 = vld [vmem:[#allocation6 + $0x8] sm:$0xff]
    %v149 = vld [vmem:[#allocation6 + $0x10] sm:$0xff]
    %v150 = vld [vmem:[#allocation6 + $0x18] sm:$0xff]
    %v151 = vld [vmem:[#allocation6 + $0x20] sm:$0xff]
    %v152 = vld [vmem:[#allocation6 + $0x28] sm:$0xff]
    %v153 = vmul.f32 %v143, %v143
    %v154 = vmul.f32 %v144, %v144
    %v155 = vmul.f32 %v145, %v145
    %v156 = vmul.f32 %v146, %v146
    %v157 = vmul.f32 %v147, %v147
    %v158 = vmul.f32 %v148, %v148
    %v159 = vmul.f32 %v149, %v149
    %v160 = vmul.f32 %v150, %v150
    %v161 = vmul.f32 %v151, %v151
    %v162 = vmul.f32 %v152, %v152
    %vm163 = vcmask 523264
    %v164 = vsel %vm163, %v153, 0.0
    %165 = vadd.xlane.f32.xlu0 %v164
    %v166 = vpop.xlane.xlu0 %165
    %v167 = vsel %vm163, %v154, 0.0
    %168 = vadd.xlane.f32.xlu0 %v167
    %v169 = vpop.xlane.xlu0 %168
    %v170 = vsel %vm163, %v155, 0.0
    %171 = vadd.xlane.f32.xlu0 %v170
    %v172 = vpop.xlane.xlu0 %171
    %v173 = vsel %vm163, %v156, 0.0
    %174 = vadd.xlane.f32.xlu0 %v173
    %v175 = vpop.xlane.xlu0 %174
    %v176 = vsel %vm163, %v157, 0.0
    %177 = vadd.xlane.f32.xlu0 %v176
    %v178 = vpop.xlane.xlu0 %177
    %v179 = vsel %vm163, %v158, 0.0
    %180 = vadd.xlane.f32.xlu0 %v179
    %v181 = vpop.xlane.xlu0 %180
    %v182 = vsel %vm163, %v159, 0.0
    %183 = vadd.xlane.f32.xlu0 %v182
    %v184 = vpop.xlane.xlu0 %183
    %v185 = vsel %vm163, %v160, 0.0
    %186 = vadd.xlane.f32.xlu0 %v185
    %v187 = vpop.xlane.xlu0 %186
    %v188 = vsel %vm163, %v161, 0.0
    %189 = vadd.xlane.f32.xlu0 %v188
    %v190 = vpop.xlane.xlu0 %189
    %v191 = vsel %vm163, %v162, 0.0
    %192 = vadd.xlane.f32.xlu0 %v191
    %v193 = vpop.xlane.xlu0 %192
    %v194 = vrcp.pop 64.0
    %v195 = vmul.f32 64.0, %v194
    %v196 = vsub.f32 1.0, %v195
    %v197 = vmul.f32 %v194, %v196
    %v198 = vadd.f32 %v194, %v197
    %vm199 = vweird.f32 %v194
    %v200 = vsel %vm199, %v194, %v198
    %v201 = vmul.f32 %v166, %v200
    %v202 = vmul.f32 %v169, %v200
    %v203 = vmul.f32 %v172, %v200
    %v204 = vmul.f32 %v175, %v200
    %v205 = vmul.f32 %v178, %v200
    %v206 = vmul.f32 %v181, %v200
    %v207 = vmul.f32 %v184, %v200
    %v208 = vmul.f32 %v187, %v200
    %v209 = vmul.f32 %v190, %v200
    %v210 = vmul.f32 %v193, %v200
    %v211 = vadd.f32 %v201, 1e-06
    %v212 = vadd.f32 %v202, 1e-06
    %v213 = vadd.f32 %v203, 1e-06
    %v214 = vadd.f32 %v204, 1e-06
    %v215 = vadd.f32 %v205, 1e-06
    %v216 = vadd.f32 %v206, 1e-06
    %v217 = vadd.f32 %v207, 1e-06
    %v218 = vadd.f32 %v208, 1e-06
    %v219 = vadd.f32 %v209, 1e-06
    %v220 = vadd.f32 %v210, 1e-06
    %v221 = vrsqrt.pop %v211
    %v222 = vmul.f32 %v221, %v211
    %v223 = vmul.f32 %v222, %v221
    %v224 = vmul.f32 0.5, %v223
    %v225 = vsub.f32 1.5, %v224
    %v226 = vmul.f32 %v221, %v225
    %vm227 = vweird.f32 %v211
    %vm228 = vweird.f32 %v221
    %vm229 = vmor %vm227, %vm228
    %v230 = vsel %vm229, %v221, %v226
    %v231 = vrsqrt.pop %v212
    %v232 = vmul.f32 %v231, %v212
    %v233 = vmul.f32 %v232, %v231
    %v234 = vmul.f32 0.5, %v233
    %v235 = vsub.f32 1.5, %v234
    %v236 = vmul.f32 %v231, %v235
    %vm237 = vweird.f32 %v212
    %vm238 = vweird.f32 %v231
    %vm239 = vmor %vm237, %vm238
    %v240 = vsel %vm239, %v231, %v236
    %v241 = vrsqrt.pop %v213
    %v242 = vmul.f32 %v241, %v213
    %v243 = vmul.f32 %v242, %v241
    %v244 = vmul.f32 0.5, %v243
    %v245 = vsub.f32 1.5, %v244
    %v246 = vmul.f32 %v241, %v245
    %vm247 = vweird.f32 %v213
    %vm248 = vweird.f32 %v241
    %vm249 = vmor %vm247, %vm248
    %v250 = vsel %vm249, %v241, %v246
    %v251 = vrsqrt.pop %v214
    %v252 = vmul.f32 %v251, %v214
    %v253 = vmul.f32 %v252, %v251
    %v254 = vmul.f32 0.5, %v253
    %v255 = vsub.f32 1.5, %v254
    %v256 = vmul.f32 %v251, %v255
    %vm257 = vweird.f32 %v214
    %vm258 = vweird.f32 %v251
    %vm259 = vmor %vm257, %vm258
    %v260 = vsel %vm259, %v251, %v256
    %v261 = vrsqrt.pop %v215
    %v262 = vmul.f32 %v261, %v215
    %v263 = vmul.f32 %v262, %v261
    %v264 = vmul.f32 0.5, %v263
    %v265 = vsub.f32 1.5, %v264
    %v266 = vmul.f32 %v261, %v265
    %vm267 = vweird.f32 %v215
    %vm268 = vweird.f32 %v261
    %vm269 = vmor %vm267, %vm268
    %v270 = vsel %vm269, %v261, %v266
    %v271 = vrsqrt.pop %v216
    %v272 = vmul.f32 %v271, %v216
    %v273 = vmul.f32 %v272, %v271
    %v274 = vmul.f32 0.5, %v273
    %v275 = vsub.f32 1.5, %v274
    %v276 = vmul.f32 %v271, %v275
    %vm277 = vweird.f32 %v216
    %vm278 = vweird.f32 %v271
    %vm279 = vmor %vm277, %vm278
    %v280 = vsel %vm279, %v271, %v276
    %v281 = vrsqrt.pop %v217
    %v282 = vmul.f32 %v281, %v217
    %v283 = vmul.f32 %v282, %v281
    %v284 = vmul.f32 0.5, %v283
    %v285 = vsub.f32 1.5, %v284
    %v286 = vmul.f32 %v281, %v285
    %vm287 = vweird.f32 %v217
    %vm288 = vweird.f32 %v281
    %vm289 = vmor %vm287, %vm288
    %v290 = vsel %vm289, %v281, %v286
    %v291 = vrsqrt.pop %v218
    %v292 = vmul.f32 %v291, %v218
    %v293 = vmul.f32 %v292, %v291
    %v294 = vmul.f32 0.5, %v293
    %v295 = vsub.f32 1.5, %v294
    %v296 = vmul.f32 %v291, %v295
    %vm297 = vweird.f32 %v218
    %vm298 = vweird.f32 %v291
    %vm299 = vmor %vm297, %vm298
    %v300 = vsel %vm299, %v291, %v296
    %v301 = vrsqrt.pop %v219
    %v302 = vmul.f32 %v301, %v219
    %v303 = vmul.f32 %v302, %v301
    %v304 = vmul.f32 0.5, %v303
    %v305 = vsub.f32 1.5, %v304
    %v306 = vmul.f32 %v301, %v305
    %vm307 = vweird.f32 %v219
    %vm308 = vweird.f32 %v301
    %vm309 = vmor %vm307, %vm308
    %v310 = vsel %vm309, %v301, %v306
    %v311 = vrsqrt.pop %v220
    %v312 = vmul.f32 %v311, %v220
    %v313 = vmul.f32 %v312, %v311
    %v314 = vmul.f32 0.5, %v313
    %v315 = vsub.f32 1.5, %v314
    %v316 = vmul.f32 %v311, %v315
    %vm317 = vweird.f32 %v220
    %vm318 = vweird.f32 %v311
    %vm319 = vmor %vm317, %vm318
    %v320 = vsel %vm319, %v311, %v316
    %v321 = vmul.f32 %v143, %v230
    %v322 = vmul.f32 %v144, %v240
    %v323 = vmul.f32 %v145, %v250
    %v324 = vmul.f32 %v146, %v260
    %v325 = vmul.f32 %v147, %v270
    %v326 = vmul.f32 %v148, %v280
    %v327 = vmul.f32 %v149, %v290
    %v328 = vmul.f32 %v150, %v300
    %v329 = vmul.f32 %v151, %v310
    %v330 = vmul.f32 %v152, %v320
    %v331 = vld [vmem:[%s3] sm:$0x1]
    %v333 = vperm.slane %v331, 0
    %v335 = vmul.f32 %v321, %v333
    %v336 = vmul.f32 %v322, %v333
    %v337 = vmul.f32 %v323, %v333
    %v338 = vmul.f32 %v324, %v333
    %v339 = vmul.f32 %v325, %v333
    %v340 = vmul.f32 %v326, %v333
    %v341 = vmul.f32 %v327, %v333
    %v342 = vmul.f32 %v328, %v333
    %v343 = vmul.f32 %v329, %v333
    %v344 = vmul.f32 %v330, %v333
    %v345 = vpack.c.bf16 %v336, %v335
    %v346 = vpack.c.bf16 %v338, %v337
    %v347 = vpack.c.bf16 %v340, %v339
    %v348 = vpack.c.bf16 %v342, %v341
    %v349 = vpack.c.bf16 %v344, %v343
    %v350 = vld [vmem:[#allocation9] sm:$0xf]
    %v351 = vld [vmem:[#allocation9 + $0x4] sm:$0xf]
    %v352 = vld [vmem:[#allocation9 + $0x8] sm:$0xf]
    %v353 = vld [vmem:[#allocation9 + $0xc] sm:$0xf]
    %v354 = vld [vmem:[#allocation9 + $0x10] sm:$0xf]
    %v355 = vld [vmem:[#allocation9 + $0x14] sm:$0xf]
    %v356 = vld [vmem:[#allocation9 + $0x18] sm:$0xf]
    %v357 = vld [vmem:[#allocation9 + $0x1c] sm:$0xf]
    %v366 = vunpack.c.l.b16 %v350
    %v367 = vunpack.c.l.b16 %v351
    %v368 = vunpack.c.l.b16 %v352
    %v369 = vunpack.c.l.b16 %v353
    %v370 = vunpack.c.l.b16 %v354
    %v371 = vunpack.c.l.b16 %v355
    %v372 = vunpack.c.l.b16 %v356
    %v373 = vunpack.c.l.b16 %v357
    %v374 = vpack.c.b16 %v367, %v366
    %v375 = vpack.c.b16 %v369, %v368
    %v376 = vpack.c.b16 %v371, %v370
    %v377 = vpack.c.b16 %v373, %v372
    %v383 = vsel %vm163, %v345, 0
    %v386 = vsel %vm163, %v346, 0
    %v389 = vsel %vm163, %v347, 0
    %v392 = vsel %vm163, %v348, 0
    %v395 = vsel %vm163, %v349, 0
    %397 = vmatpush.bf16.msra.mxu0 0
    %398 = vmatpush.bf16.msra.mxu0 0
    %399 = vmatpush.bf16.msra.mxu0 0
    %400 = vmatpush.bf16.msra.mxu0 0
    %401 = vmatpush.bf16.msra.mxu0 %v377
    %402 = vmatpush.bf16.msra.mxu0 %v376
    %403 = vmatpush.bf16.msra.mxu0 %v375
    %404 = vmatpush.bf16.msra.mxu0 %v374
    %405 = vmatmul.bf16.gmra.mxu0 %v383
    %v406 = vpop.f32.mrf.mxu0
    %v407 = vadd.f32 0.0, %v406
    %v408 = vpop.f32.mrf.mxu0
    %v409 = vadd.f32 0.0, %v408
    %410 = vmatmul.bf16.gmra.mxu0 %v386
    %v411 = vpop.f32.mrf.mxu0
    %v412 = vadd.f32 0.0, %v411
    %v413 = vpop.f32.mrf.mxu0
    %v414 = vadd.f32 0.0, %v413
    %415 = vmatmul.bf16.gmra.mxu0 %v389
    %v416 = vpop.f32.mrf.mxu0
    %v417 = vadd.f32 0.0, %v416
    %v418 = vpop.f32.mrf.mxu0
    %v419 = vadd.f32 0.0, %v418
    %420 = vmatmul.bf16.gmra.mxu0 %v392
    %v421 = vpop.f32.mrf.mxu0
    %v422 = vadd.f32 0.0, %v421
    %v423 = vpop.f32.mrf.mxu0
    %v424 = vadd.f32 0.0, %v423
    %425 = vmatmul.bf16.gmra.mxu0 %v395
    %v426 = vpop.f32.mrf.mxu0
    %v427 = vadd.f32 0.0, %v426
    %v428 = vpop.f32.mrf.mxu0
    %v429 = vadd.f32 0.0, %v428
    %430 = vdwg.mxu0
    %v431 = vld [vmem:[#allocation11] sm:$0xff]
    %v432 = vld [vmem:[#allocation11 + $0x8] sm:$0xff]
    %v433 = vld [vmem:[#allocation12] sm:$0xff]
    %v434 = vld [vmem:[#allocation12 + $0x8] sm:$0xff]
    %v435 = vsub.f32 0.0, %v407
    %v436 = vsub.f32 0.0, %v409
    %v437 = vsub.f32 0.0, %v412
    %v438 = vsub.f32 0.0, %v414
    %v439 = vsub.f32 0.0, %v417
    %v440 = vsub.f32 0.0, %v419
    %v441 = vsub.f32 0.0, %v422
    %v442 = vsub.f32 0.0, %v424
    %v443 = vsub.f32 0.0, %v427
    %v444 = vsub.f32 0.0, %v429
    %455 = vrot.lane.b32.xlu0 %v435, 112
    %v456 = vpop.permute.xlu0 %455
    %457 = vrot.lane.b32.xlu0 %v436, 112
    %v458 = vpop.permute.xlu0 %457
    %459 = vrot.lane.b32.xlu0 %v437, 112
    %v460 = vpop.permute.xlu0 %459
    %461 = vrot.lane.b32.xlu0 %v438, 112
    %v462 = vpop.permute.xlu0 %461
    %463 = vrot.lane.b32.xlu0 %v439, 112
    %v464 = vpop.permute.xlu0 %463
    %465 = vrot.lane.b32.xlu0 %v440, 112
    %v466 = vpop.permute.xlu0 %465
    %467 = vrot.lane.b32.xlu0 %v441, 112
    %v468 = vpop.permute.xlu0 %467
    %469 = vrot.lane.b32.xlu0 %v442, 112
    %v470 = vpop.permute.xlu0 %469
    %471 = vrot.lane.b32.xlu0 %v443, 112
    %v472 = vpop.permute.xlu0 %471
    %473 = vrot.lane.b32.xlu0 %v444, 112
    %v474 = vpop.permute.xlu0 %473
    %495 = vrot.lane.b32.xlu0 %v407, 16
    %v496 = vpop.permute.xlu0 %495
    %497 = vrot.lane.b32.xlu0 %v409, 16
    %v498 = vpop.permute.xlu0 %497
    %499 = vrot.lane.b32.xlu0 %v412, 16
    %v500 = vpop.permute.xlu0 %499
    %501 = vrot.lane.b32.xlu0 %v414, 16
    %v502 = vpop.permute.xlu0 %501
    %503 = vrot.lane.b32.xlu0 %v417, 16
    %v504 = vpop.permute.xlu0 %503
    %505 = vrot.lane.b32.xlu0 %v419, 16
    %v506 = vpop.permute.xlu0 %505
    %507 = vrot.lane.b32.xlu0 %v422, 16
    %v508 = vpop.permute.xlu0 %507
    %509 = vrot.lane.b32.xlu0 %v424, 16
    %v510 = vpop.permute.xlu0 %509
    %511 = vrot.lane.b32.xlu0 %v427, 16
    %v512 = vpop.permute.xlu0 %511
    %513 = vrot.lane.b32.xlu0 %v429, 16
    %v514 = vpop.permute.xlu0 %513
    %vm525 = vcmask 130048
    %v526 = vsel %vm525, %v456, %v496
    %v527 = vsel %vm525, %v458, %v498
    %v528 = vsel %vm525, %v460, %v500
    %v529 = vsel %vm525, %v462, %v502
    %v530 = vsel %vm525, %v464, %v504
    %v531 = vsel %vm525, %v466, %v506
    %v532 = vsel %vm525, %v468, %v508
    %v533 = vsel %vm525, %v470, %v510
    %v534 = vsel %vm525, %v472, %v512
    %v535 = vsel %vm525, %v474, %v514
    %vm536 = vcmask 261120
    %v537 = vsel %vm536, %v526, %v456
    %v538 = vsel %vm536, %v527, %v458
    %v539 = vsel %vm536, %v528, %v460
    %v540 = vsel %vm536, %v529, %v462
    %v541 = vsel %vm536, %v530, %v464
    %v542 = vsel %vm536, %v531, %v466
    %v543 = vsel %vm536, %v532, %v468
    %v544 = vsel %vm536, %v533, %v470
    %v545 = vsel %vm536, %v534, %v472
    %v546 = vsel %vm536, %v535, %v474
    %vm547 = vcmask 392192
    %v548 = vsel %vm547, %v537, %v496
    %v549 = vsel %vm547, %v538, %v498
    %v550 = vsel %vm547, %v539, %v500
    %v551 = vsel %vm547, %v540, %v502
    %v552 = vsel %vm547, %v541, %v504
    %v553 = vsel %vm547, %v542, %v506
    %v554 = vsel %vm547, %v543, %v508
    %v555 = vsel %vm547, %v544, %v510
    %v556 = vsel %vm547, %v545, %v512
    %v557 = vsel %vm547, %v546, %v514
    %v558 = vsel %vm163, %v548, %v456
    %v559 = vsel %vm163, %v549, %v458
    %v560 = vsel %vm163, %v550, %v460
    %v561 = vsel %vm163, %v551, %v462
    %v562 = vsel %vm163, %v552, %v464
    %v563 = vsel %vm163, %v553, %v466
    %v564 = vsel %vm163, %v554, %v468
    %v565 = vsel %vm163, %v555, %v470
    %v566 = vsel %vm163, %v556, %v472
    %v567 = vsel %vm163, %v557, %v474
    %vm568 = vcmask 654336
    %v569 = vsel %vm568, %v558, %v496
    %v570 = vsel %vm568, %v559, %v498
    %v571 = vsel %vm568, %v560, %v500
    %v572 = vsel %vm568, %v561, %v502
    %v573 = vsel %vm568, %v562, %v504
    %v574 = vsel %vm568, %v563, %v506
    %v575 = vsel %vm568, %v564, %v508
    %v576 = vsel %vm568, %v565, %v510
    %v577 = vsel %vm568, %v566, %v512
    %v578 = vsel %vm568, %v567, %v514
    %vm579 = vcmask 785408
    %v580 = vsel %vm579, %v569, %v407
    %v581 = vsel %vm579, %v570, %v409
    %v582 = vsel %vm579, %v571, %v412
    %v583 = vsel %vm579, %v572, %v414
    %v584 = vsel %vm579, %v573, %v417
    %v585 = vsel %vm579, %v574, %v419
    %v586 = vsel %vm579, %v575, %v422
    %v587 = vsel %vm579, %v576, %v424
    %v588 = vsel %vm579, %v577, %v427
    %v589 = vsel %vm579, %v578, %v429
    %v590 = vmul.f32 %v407, %v431
    %v591 = vmul.f32 %v409, %v431
    %v592 = vmul.f32 %v412, %v431
    %v593 = vmul.f32 %v414, %v431
    %v594 = vmul.f32 %v417, %v432
    %v595 = vmul.f32 %v419, %v432
    %v596 = vmul.f32 %v422, %v432
    %v597 = vmul.f32 %v424, %v432
    %v598 = vmul.f32 %v427, %v432
    %v599 = vmul.f32 %v429, %v432
    %v600 = vmul.f32 %v580, %v433
    %v601 = vmul.f32 %v581, %v433
    %v602 = vmul.f32 %v582, %v433
    %v603 = vmul.f32 %v583, %v433
    %v604 = vmul.f32 %v584, %v434
    %v605 = vmul.f32 %v585, %v434
    %v606 = vmul.f32 %v586, %v434
    %v607 = vmul.f32 %v587, %v434
    %v608 = vmul.f32 %v588, %v434
    %v609 = vmul.f32 %v589, %v434
    %v610 = vadd.f32 %v590, %v600
    %v611 = vadd.f32 %v591, %v601
    %v612 = vadd.f32 %v592, %v602
    %v613 = vadd.f32 %v593, %v603
    %v614 = vadd.f32 %v594, %v604
    %v615 = vadd.f32 %v595, %v605
    %v616 = vadd.f32 %v596, %v606
    %v617 = vadd.f32 %v597, %v607
    %v618 = vadd.f32 %v598, %v608
    %v619 = vadd.f32 %v599, %v609
    %630 = vrot.lane.b32.xlu0 %v610, 64
    %v631 = vpop.permute.xlu0 %630
    %632 = vrot.lane.b32.xlu0 %v611, 64
    %v633 = vpop.permute.xlu0 %632
    %634 = vrot.lane.b32.xlu0 %v612, 64
    %v635 = vpop.permute.xlu0 %634
    %636 = vrot.lane.b32.xlu0 %v613, 64
    %v637 = vpop.permute.xlu0 %636
    %638 = vrot.lane.b32.xlu0 %v614, 64
    %v639 = vpop.permute.xlu0 %638
    %640 = vrot.lane.b32.xlu0 %v615, 64
    %v641 = vpop.permute.xlu0 %640
    %642 = vrot.lane.b32.xlu0 %v616, 64
    %v643 = vpop.permute.xlu0 %642
    %644 = vrot.lane.b32.xlu0 %v617, 64
    %v645 = vpop.permute.xlu0 %644
    %646 = vrot.lane.b32.xlu0 %v618, 64
    %v647 = vpop.permute.xlu0 %646
    %648 = vrot.lane.b32.xlu0 %v619, 64
    %v649 = vpop.permute.xlu0 %648
    %660 = vst.msk [vmem:[#allocation2] sm:$0xff] %vm163, %v631
    %661 = vst.msk [vmem:[#allocation2 + $0x8] sm:$0xff] %vm163, %v633
    %662 = vst.msk [vmem:[#allocation2 + $0x10] sm:$0xff] %vm163, %v635
    %663 = vst.msk [vmem:[#allocation2 + $0x18] sm:$0xff] %vm163, %v637
    %664 = vst.msk [vmem:[#allocation2 + $0x20] sm:$0xff] %vm163, %v639
    %665 = vst.msk [vmem:[#allocation2 + $0x28] sm:$0xff] %vm163, %v641
    %666 = vst.msk [vmem:[#allocation2 + $0x30] sm:$0xff] %vm163, %v643
    %667 = vst.msk [vmem:[#allocation2 + $0x38] sm:$0xff] %vm163, %v645
    %668 = vst.msk [vmem:[#allocation2 + $0x40] sm:$0xff] %vm163, %v647
    %669 = vst.msk [vmem:[#allocation2 + $0x48] sm:$0xff] %vm163, %v649
    %s670 = sld [smem:[#allocation5]]
    %s671 = smul.u32 %s670, 8
    %s672 = sld [smem:[#allocation5 + $0x8]]
    %s673 = smul.u32 %s672, 8
    %s674 = sadd.s32 %s673, 32
    %s675 = scalar_lea.vmem [#allocation2], %s671
    %v676 = vld [vmem:[%s675] sm:$0xff]
    %677 = vst.msk [vmem:[#allocation3] sm:$0xff] %vm163, %v676
    %s678 = scalar_lea.vmem [#allocation2], %s674
    %v679 = vld [vmem:[%s678] sm:$0xff]
    %680 = vst.msk [vmem:[#allocation3 + $0x8] sm:$0xff] %vm163, %v679
    %s681 = sld [smem:[#allocation5 + $0x1]]
    %s682 = smul.u32 %s681, 8
    %s683 = sld [smem:[#allocation5 + $0x9]]
    %s684 = smul.u32 %s683, 8
    %s685 = sadd.s32 %s684, 32
    %s686 = scalar_lea.vmem [#allocation2], %s682
    %v687 = vld [vmem:[%s686] sm:$0xff]
    %688 = vst.msk [vmem:[#allocation3 + $0x10] sm:$0xff] %vm163, %v687
    %s689 = scalar_lea.vmem [#allocation2], %s685
    %v690 = vld [vmem:[%s689] sm:$0xff]
    %691 = vst.msk [vmem:[#allocation3 + $0x18] sm:$0xff] %vm163, %v690
    %s692 = sld [smem:[#allocation5 + $0x2]]
    %s693 = smul.u32 %s692, 8
    %s694 = sld [smem:[#allocation5 + $0xa]]
    %s695 = smul.u32 %s694, 8
    %s696 = sadd.s32 %s695, 32
    %s697 = scalar_lea.vmem [#allocation2], %s693
    %v698 = vld [vmem:[%s697] sm:$0xff]
    %699 = vst.msk [vmem:[#allocation3 + $0x20] sm:$0xff] %vm163, %v698
    %s700 = scalar_lea.vmem [#allocation2], %s696
    %v701 = vld [vmem:[%s700] sm:$0xff]
    %702 = vst.msk [vmem:[#allocation3 + $0x28] sm:$0xff] %vm163, %v701
    %s703 = sld [smem:[#allocation5 + $0x3]]
    %s704 = smul.u32 %s703, 8
    %s705 = sld [smem:[#allocation5 + $0xb]]
    %s706 = smul.u32 %s705, 8
    %s707 = sadd.s32 %s706, 32
    %s708 = scalar_lea.vmem [#allocation2], %s704
    %v709 = vld [vmem:[%s708] sm:$0xff]
    %710 = vst.msk [vmem:[#allocation3 + $0x30] sm:$0xff] %vm163, %v709
    %s711 = scalar_lea.vmem [#allocation2], %s707
    %v712 = vld [vmem:[%s711] sm:$0xff]
    %713 = vst.msk [vmem:[#allocation3 + $0x38] sm:$0xff] %vm163, %v712
    %s714 = sld [smem:[#allocation5 + $0x4]]
    %s715 = smul.u32 %s714, 8
    %s716 = sld [smem:[#allocation5 + $0xc]]
    %s717 = smul.u32 %s716, 8
    %s718 = sadd.s32 %s717, 32
    %s719 = scalar_lea.vmem [#allocation2], %s715
    %v720 = vld [vmem:[%s719] sm:$0xff]
    %721 = vst.msk [vmem:[#allocation3 + $0x40] sm:$0xff] %vm163, %v720
    %s722 = scalar_lea.vmem [#allocation2], %s718
    %v723 = vld [vmem:[%s722] sm:$0xff]
    %724 = vst.msk [vmem:[#allocation3 + $0x48] sm:$0xff] %vm163, %v723
    %s725 = sld [smem:[#allocation5 + $0x5]]
    %s726 = smul.u32 %s725, 8
    %s727 = sld [smem:[#allocation5 + $0xd]]
    %s728 = smul.u32 %s727, 8
    %s729 = sadd.s32 %s728, 32
    %s730 = scalar_lea.vmem [#allocation2], %s726
    %v731 = vld [vmem:[%s730] sm:$0xff]
    %732 = vst.msk [vmem:[#allocation3 + $0x50] sm:$0xff] %vm163, %v731
    %s733 = scalar_lea.vmem [#allocation2], %s729
    %v734 = vld [vmem:[%s733] sm:$0xff]
    %735 = vst.msk [vmem:[#allocation3 + $0x58] sm:$0xff] %vm163, %v734
    %s736 = sld [smem:[#allocation5 + $0x6]]
    %s737 = smul.u32 %s736, 8
    %s738 = sld [smem:[#allocation5 + $0xe]]
    %s739 = smul.u32 %s738, 8
    %s740 = sadd.s32 %s739, 32
    %s741 = scalar_lea.vmem [#allocation2], %s737
    %v742 = vld [vmem:[%s741] sm:$0xff]
    %743 = vst.msk [vmem:[#allocation3 + $0x60] sm:$0xff] %vm163, %v742
    %s744 = scalar_lea.vmem [#allocation2], %s740
    %v745 = vld [vmem:[%s744] sm:$0xff]
    %746 = vst.msk [vmem:[#allocation3 + $0x68] sm:$0xff] %vm163, %v745
    %s747 = sld [smem:[#allocation5 + $0x7]]
    %s748 = smul.u32 %s747, 8
    %s749 = sld [smem:[#allocation5 + $0xf]]
    %s750 = smul.u32 %s749, 8
    %s751 = sadd.s32 %s750, 32
    %s752 = scalar_lea.vmem [#allocation2], %s748
    %v753 = vld [vmem:[%s752] sm:$0xff]
    %754 = vst.msk [vmem:[#allocation3 + $0x70] sm:$0xff] %vm163, %v753
    %s755 = scalar_lea.vmem [#allocation2], %s751
    %v756 = vld [vmem:[%s755] sm:$0xff]
    %757 = vst.msk [vmem:[#allocation3 + $0x78] sm:$0xff] %vm163, %v756
    %v758 = vld [vmem:[#allocation3] sm:$0xff]
    %v759 = vld [vmem:[#allocation3 + $0x8] sm:$0xff]
    %v760 = vld [vmem:[#allocation3 + $0x10] sm:$0xff]
    %v761 = vld [vmem:[#allocation3 + $0x18] sm:$0xff]
    %v762 = vld [vmem:[#allocation3 + $0x20] sm:$0xff]
    %v763 = vld [vmem:[#allocation3 + $0x28] sm:$0xff]
    %v764 = vld [vmem:[#allocation3 + $0x30] sm:$0xff]
    %v765 = vld [vmem:[#allocation3 + $0x38] sm:$0xff]
    %v766 = vld [vmem:[#allocation3 + $0x40] sm:$0xff]
    %v767 = vld [vmem:[#allocation3 + $0x48] sm:$0xff]
    %v768 = vld [vmem:[#allocation3 + $0x50] sm:$0xff]
    %v769 = vld [vmem:[#allocation3 + $0x58] sm:$0xff]
    %v770 = vld [vmem:[#allocation3 + $0x60] sm:$0xff]
    %v771 = vld [vmem:[#allocation3 + $0x68] sm:$0xff]
    %v772 = vld [vmem:[#allocation3 + $0x70] sm:$0xff]
    %v773 = vld [vmem:[#allocation3 + $0x78] sm:$0xff]
    %v774 = vpack.c.bf16 %v759, %v758
    %v775 = vpack.c.bf16 %v761, %v760
    %v776 = vpack.c.bf16 %v763, %v762
    %v777 = vpack.c.bf16 %v765, %v764
    %v778 = vpack.c.bf16 %v767, %v766
    %v779 = vpack.c.bf16 %v769, %v768
    %v780 = vpack.c.bf16 %v771, %v770
    %v781 = vpack.c.bf16 %v773, %v772
    %782 = vrot.lane.b32.xlu0 %v610, 96
    %v783 = vpop.permute.xlu0 %782
    %784 = vrot.lane.b32.xlu0 %v611, 96
    %v785 = vpop.permute.xlu0 %784
    %786 = vrot.lane.b32.xlu0 %v612, 96
    %v787 = vpop.permute.xlu0 %786
    %788 = vrot.lane.b32.xlu0 %v613, 96
    %v789 = vpop.permute.xlu0 %788
    %v794 = vpack.c.bf16 %v611, %v610
    %v795 = vpack.c.bf16 %v613, %v612
    %v796 = vpack.c.bf16 %v785, %v783
    %v797 = vpack.c.bf16 %v789, %v787
    %v798 = vld [vmem:[%s7] sm:$0xff]
    %v799 = vld [vmem:[%s7 + $0x8] sm:$0xff]
    %v800 = vld [vmem:[%s7 + $0x10] sm:$0xff]
    %v801 = vld [vmem:[%s7 + $0x18] sm:$0xff]
    %v802 = vld [vmem:[%s7 + $0x20] sm:$0xff]
    %v803 = vld [vmem:[%s7 + $0x28] sm:$0xff]
    %v804 = vld [vmem:[%s7 + $0x30] sm:$0xff]
    %v805 = vld [vmem:[%s7 + $0x38] sm:$0xff]
    %v807 = vsel %vm536, %v794, 0
    %v810 = vsel %vm536, %v795, 0
    %v813 = vsel %vm536, %v796, 0
    %v816 = vsel %vm536, %v797, 0
    %v819 = vsel %vm536, %v774, 0
    %v822 = vsel %vm536, %v775, 0
    %v825 = vsel %vm536, %v776, 0
    %v828 = vsel %vm536, %v777, 0
    %v831 = vsel %vm536, %v778, 0
    %v834 = vsel %vm536, %v779, 0
    %v837 = vsel %vm536, %v780, 0
    %v840 = vsel %vm536, %v781, 0
    %842 = vmatpush.bf16.xpose.msra.mxu0 %v840
    %843 = vmatpush.bf16.xpose.msra.mxu0 %v837
    %844 = vmatpush.bf16.xpose.msra.mxu0 %v834
    %845 = vmatpush.bf16.xpose.msra.mxu0 %v831
    %846 = vmatpush.bf16.xpose.msra.mxu0 %v828
    %847 = vmatpush.bf16.xpose.msra.mxu0 %v825
    %848 = vmatpush.bf16.xpose.msra.mxu0 %v822
    %849 = vmatpush.bf16.xpose.msra.mxu0 %v819
    %850 = vmatmul.bf16.gmra.mxu0 %v807
    %v851 = vpop.f32.mrf.mxu0
    %v852 = vadd.f32 %v798, %v851
    %v853 = vpop.f32.mrf.mxu0
    %v854 = vadd.f32 %v799, %v853
    %855 = vmatmul.bf16.gmra.mxu0 %v810
    %v856 = vpop.f32.mrf.mxu0
    %v857 = vadd.f32 %v800, %v856
    %v858 = vpop.f32.mrf.mxu0
    %v859 = vadd.f32 %v801, %v858
    %860 = vmatmul.bf16.gmra.mxu0 %v813
    %v861 = vpop.f32.mrf.mxu0
    %v862 = vadd.f32 %v802, %v861
    %v863 = vpop.f32.mrf.mxu0
    %v864 = vadd.f32 %v803, %v863
    %865 = vmatmul.bf16.gmra.mxu0 %v816
    %v866 = vpop.f32.mrf.mxu0
    %v867 = vadd.f32 %v804, %v866
    %v868 = vpop.f32.mrf.mxu0
    %v869 = vadd.f32 %v805, %v868
    %870 = vdwg.mxu0
    %871 = vmax.xlane.f32.xlu0 %v852
    %v872 = vpop.xlane.xlu0 %871
    %873 = vmax.xlane.f32.xlu0 %v854
    %v874 = vpop.xlane.xlu0 %873
    %875 = vmax.xlane.f32.xlu0 %v857
    %v876 = vpop.xlane.xlu0 %875
    %877 = vmax.xlane.f32.xlu0 %v859
    %v878 = vpop.xlane.xlu0 %877
    %879 = vmax.xlane.f32.xlu0 %v862
    %v880 = vpop.xlane.xlu0 %879
    %881 = vmax.xlane.f32.xlu0 %v864
    %v882 = vpop.xlane.xlu0 %881
    %883 = vmax.xlane.f32.xlu0 %v867
    %v884 = vpop.xlane.xlu0 %883
    %885 = vmax.xlane.f32.xlu0 %v869
    %v886 = vpop.xlane.xlu0 %885
    %v887 = vmax.f32 %v872, 0.0
    %v888 = vmax.f32 %v874, 0.0
    %v889 = vmax.f32 %v876, 0.0
    %v890 = vmax.f32 %v878, 0.0
    %v891 = vmax.f32 %v880, 0.0
    %v892 = vmax.f32 %v882, 0.0
    %v893 = vmax.f32 %v884, 0.0
    %v894 = vmax.f32 %v886, 0.0
    %v895 = vsub.f32 %v852, %v887
    %v896 = vsub.f32 %v854, %v888
    %v897 = vsub.f32 %v857, %v889
    %v898 = vsub.f32 %v859, %v890
    %v899 = vsub.f32 %v862, %v891
    %v900 = vsub.f32 %v864, %v892
    %v901 = vsub.f32 %v867, %v893
    %v902 = vsub.f32 %v869, %v894
    %v903 = vmul.f32 %v895, 1.442695
    %v904 = vpow.pop %v903
    %v905 = vmul.f32 %v896, 1.442695
    %v906 = vpow.pop %v905
    %v907 = vmul.f32 %v897, 1.442695
    %v908 = vpow.pop %v907
    %v909 = vmul.f32 %v898, 1.442695
    %v910 = vpow.pop %v909
    %v911 = vmul.f32 %v899, 1.442695
    %v912 = vpow.pop %v911
    %v913 = vmul.f32 %v900, 1.442695
    %v914 = vpow.pop %v913
    %v915 = vmul.f32 %v901, 1.442695
    %v916 = vpow.pop %v915
    %v917 = vmul.f32 %v902, 1.442695
    %v918 = vpow.pop %v917
    %919 = vadd.xlane.f32.xlu0 %v904
    %v920 = vpop.xlane.xlu0 %919
    %921 = vadd.xlane.f32.xlu0 %v906
    %v922 = vpop.xlane.xlu0 %921
    %923 = vadd.xlane.f32.xlu0 %v908
    %v924 = vpop.xlane.xlu0 %923
    %925 = vadd.xlane.f32.xlu0 %v910
    %v926 = vpop.xlane.xlu0 %925
    %927 = vadd.xlane.f32.xlu0 %v912
    %v928 = vpop.xlane.xlu0 %927
    %929 = vadd.xlane.f32.xlu0 %v914
    %v930 = vpop.xlane.xlu0 %929
    %931 = vadd.xlane.f32.xlu0 %v916
    %v932 = vpop.xlane.xlu0 %931
    %933 = vadd.xlane.f32.xlu0 %v918
    %v934 = vpop.xlane.xlu0 %933
    %v935 = vadd.f32 %v920, 1e-16
    %v936 = vadd.f32 %v922, 1e-16
    %v937 = vadd.f32 %v924, 1e-16
    %v938 = vadd.f32 %v926, 1e-16
    %v939 = vadd.f32 %v928, 1e-16
    %v940 = vadd.f32 %v930, 1e-16
    %v941 = vadd.f32 %v932, 1e-16
    %v942 = vadd.f32 %v934, 1e-16
    %v943 = vrcp.pop %v935
    %v944 = vrcp.pop %v936
    %v945 = vrcp.pop %v937
    %v946 = vrcp.pop %v938
    %v947 = vrcp.pop %v939
    %v948 = vrcp.pop %v940
    %v949 = vrcp.pop %v941
    %v950 = vrcp.pop %v942
    %v951 = vmul.f32 %v904, %v943
    %v952 = vmul.f32 %v906, %v944
    %v953 = vmul.f32 %v908, %v945
    %v954 = vmul.f32 %v910, %v946
    %v955 = vmul.f32 %v912, %v947
    %v956 = vmul.f32 %v914, %v948
    %v957 = vmul.f32 %v916, %v949
    %v958 = vmul.f32 %v918, %v950
    %v959 = vpack.c.bf16 %v952, %v951
    %v960 = vpack.c.bf16 %v954, %v953
    %v961 = vpack.c.bf16 %v956, %v955
    %v962 = vpack.c.bf16 %v958, %v957
    %971 = vrot.lane.b32.xlu0 %v774, 96
    %v972 = vpop.permute.xlu0 %971
    %973 = vrot.lane.b32.xlu0 %v775, 96
    %v974 = vpop.permute.xlu0 %973
    %975 = vrot.lane.b32.xlu0 %v776, 96
    %v976 = vpop.permute.xlu0 %975
    %977 = vrot.lane.b32.xlu0 %v777, 96
    %v978 = vpop.permute.xlu0 %977
    %979 = vrot.lane.b32.xlu0 %v778, 96
    %v980 = vpop.permute.xlu0 %979
    %981 = vrot.lane.b32.xlu0 %v779, 96
    %v982 = vpop.permute.xlu0 %981
    %983 = vrot.lane.b32.xlu0 %v780, 96
    %v984 = vpop.permute.xlu0 %983
    %985 = vrot.lane.b32.xlu0 %v781, 96
    %v986 = vpop.permute.xlu0 %985
    %995 = vmatpush.bf16.msra.mxu0 %v986
    %996 = vmatpush.bf16.msra.mxu0 %v984
    %997 = vmatpush.bf16.msra.mxu0 %v982
    %998 = vmatpush.bf16.msra.mxu0 %v980
    %999 = vmatpush.bf16.msra.mxu0 %v978
    %1000 = vmatpush.bf16.msra.mxu0 %v976
    %1001 = vmatpush.bf16.msra.mxu0 %v974
    %1002 = vmatpush.bf16.msra.mxu0 %v972
    %1003 = vmatmul.bf16.gmra.mxu0 %v959
    %v1004 = vpop.f32.mrf.mxu0
    %v1005 = vadd.f32 0.0, %v1004
    %v1006 = vpop.f32.mrf.mxu0
    %v1007 = vadd.f32 0.0, %v1006
    %1008 = vmatmul.bf16.gmra.mxu0 %v960
    %v1009 = vpop.f32.mrf.mxu0
    %v1010 = vadd.f32 0.0, %v1009
    %v1011 = vpop.f32.mrf.mxu0
    %v1012 = vadd.f32 0.0, %v1011
    %1013 = vmatmul.bf16.gmra.mxu0 %v961
    %v1014 = vpop.f32.mrf.mxu0
    %v1015 = vadd.f32 0.0, %v1014
    %v1016 = vpop.f32.mrf.mxu0
    %v1017 = vadd.f32 0.0, %v1016
    %1018 = vmatmul.bf16.gmra.mxu0 %v962
    %v1019 = vpop.f32.mrf.mxu0
    %v1020 = vadd.f32 0.0, %v1019
    %v1021 = vpop.f32.mrf.mxu0
    %v1022 = vadd.f32 0.0, %v1021
    %1023 = vdwg.mxu0
    %v1024 = vpack.c.bf16 %v1007, %v1005
    %v1025 = vpack.c.bf16 %v1012, %v1010
    %v1026 = vld [vmem:[#allocation14] sm:$0xf]
    %v1027 = vld [vmem:[#allocation14 + $0x4] sm:$0xf]
    %v1028 = vld [vmem:[#allocation14 + $0x8] sm:$0xf]
    %v1029 = vld [vmem:[#allocation14 + $0xc] sm:$0xf]
    %v1030 = vpack.c.bf16 %v1017, %v1015
    %v1031 = vpack.c.bf16 %v1022, %v1020
    %v1032 = vld [vmem:[#allocation14 + $0x10] sm:$0xf]
    %v1033 = vld [vmem:[#allocation14 + $0x14] sm:$0xf]
    %v1034 = vld [vmem:[#allocation14 + $0x18] sm:$0xf]
    %v1035 = vld [vmem:[#allocation14 + $0x1c] sm:$0xf]
    %v1040 = vunpack.c.l.b16 %v1032
    %v1041 = vunpack.c.l.b16 %v1033
    %v1042 = vunpack.c.l.b16 %v1034
    %v1043 = vunpack.c.l.b16 %v1035
    %v1044 = vpack.c.b16 %v1041, %v1040
    %v1045 = vpack.c.b16 %v1043, %v1042
    %v1049 = vsel %vm536, %v1030, 0
    %v1052 = vsel %vm536, %v1031, 0
    %1054 = vmatpush.bf16.msra.mxu0 0
    %1055 = vmatpush.bf16.msra.mxu0 0
    %1056 = vmatpush.bf16.msra.mxu0 0
    %1057 = vmatpush.bf16.msra.mxu0 0
    %1058 = vmatpush.bf16.msra.mxu0 0
    %1059 = vmatpush.bf16.msra.mxu0 0
    %1060 = vmatpush.bf16.msra.mxu0 %v1045
    %1061 = vmatpush.bf16.msra.mxu0 %v1044
    %1062 = vmatmul.bf16.gmra.mxu0 %v1049
    %v1063 = vpop.f32.mrf.mxu0
    %v1064 = vadd.f32 0.0, %v1063
    %v1065 = vpop.f32.mrf.mxu0
    %v1066 = vadd.f32 0.0, %v1065
    %1067 = vmatmul.bf16.gmra.mxu0 %v1052
    %v1068 = vpop.f32.mrf.mxu0
    %v1069 = vadd.f32 0.0, %v1068
    %v1070 = vpop.f32.mrf.mxu0
    %v1071 = vadd.f32 0.0, %v1070
    %1072 = vdwg.mxu0
    %v1077 = vunpack.c.l.b16 %v1026
    %v1078 = vunpack.c.l.b16 %v1027
    %v1079 = vunpack.c.l.b16 %v1028
    %v1080 = vunpack.c.l.b16 %v1029
    %v1081 = vpack.c.b16 %v1078, %v1077
    %v1082 = vpack.c.b16 %v1080, %v1079
    %v1086 = vsel %vm536, %v1024, 0
    %v1089 = vsel %vm536, %v1025, 0
    %1091 = vmatpush.bf16.msra.mxu0 0
    %1092 = vmatpush.bf16.msra.mxu0 0
    %1093 = vmatpush.bf16.msra.mxu0 0
    %1094 = vmatpush.bf16.msra.mxu0 0
    %1095 = vmatpush.bf16.msra.mxu0 0
    %1096 = vmatpush.bf16.msra.mxu0 0
    %1097 = vmatpush.bf16.msra.mxu0 %v1082
    %1098 = vmatpush.bf16.msra.mxu0 %v1081
    %1099 = vmatmul.bf16.gmra.mxu0 %v1086
    %v1100 = vpop.f32.mrf.mxu0
    %v1101 = vadd.f32 %v1064, %v1100
    %v1102 = vpop.f32.mrf.mxu0
    %v1103 = vadd.f32 %v1066, %v1102
    %1104 = vmatmul.bf16.gmra.mxu0 %v1089
    %v1105 = vpop.f32.mrf.mxu0
    %v1106 = vadd.f32 %v1069, %v1105
    %v1107 = vpop.f32.mrf.mxu0
    %v1108 = vadd.f32 %v1071, %v1107
    %1109 = vdwg.mxu0
    %v1110 = vld [vmem:[%s1] sm:$0xff]
    %v1111 = vld [vmem:[%s1 + $0x8] sm:$0xff]
    %v1112 = vld [vmem:[%s1 + $0x10] sm:$0xff]
    %v1113 = vld [vmem:[%s1 + $0x18] sm:$0xff]
    %v1114 = vadd.f32 %v1110, %v1101
    %v1115 = vadd.f32 %v1111, %v1103
    %v1116 = vadd.f32 %v1112, %v1106
    %v1117 = vadd.f32 %v1113, %v1108
    %v1118 = vmul.f32 %v1114, %v1114
    %v1119 = vmul.f32 %v1115, %v1115
    %v1120 = vmul.f32 %v1116, %v1116
    %v1121 = vmul.f32 %v1117, %v1117
    %v1122 = vsel %vm163, %v1118, 0.0
    %1123 = vadd.xlane.f32.xlu0 %v1122
    %v1124 = vpop.xlane.xlu0 %1123
    %v1125 = vsel %vm163, %v1119, 0.0
    %1126 = vadd.xlane.f32.xlu0 %v1125
    %v1127 = vpop.xlane.xlu0 %1126
    %v1128 = vsel %vm163, %v1120, 0.0
    %1129 = vadd.xlane.f32.xlu0 %v1128
    %v1130 = vpop.xlane.xlu0 %1129
    %v1131 = vsel %vm163, %v1121, 0.0
    %1132 = vadd.xlane.f32.xlu0 %v1131
    %v1133 = vpop.xlane.xlu0 %1132
    %v1134 = vmul.f32 %v1124, %v200
    %v1135 = vmul.f32 %v1127, %v200
    %v1136 = vmul.f32 %v1130, %v200
    %v1137 = vmul.f32 %v1133, %v200
    %v1138 = vadd.f32 %v1134, 1e-06
    %v1139 = vadd.f32 %v1135, 1e-06
    %v1140 = vadd.f32 %v1136, 1e-06
    %v1141 = vadd.f32 %v1137, 1e-06
    %v1142 = vrsqrt.pop %v1138
    %v1143 = vmul.f32 %v1142, %v1138
    %v1144 = vmul.f32 %v1143, %v1142
    %v1145 = vmul.f32 0.5, %v1144
    %v1146 = vsub.f32 1.5, %v1145
    %v1147 = vmul.f32 %v1142, %v1146
    %vm1148 = vweird.f32 %v1138
    %vm1149 = vweird.f32 %v1142
    %vm1150 = vmor %vm1148, %vm1149
    %v1151 = vsel %vm1150, %v1142, %v1147
    %v1152 = vrsqrt.pop %v1139
    %v1153 = vmul.f32 %v1152, %v1139
    %v1154 = vmul.f32 %v1153, %v1152
    %v1155 = vmul.f32 0.5, %v1154
    %v1156 = vsub.f32 1.5, %v1155
    %v1157 = vmul.f32 %v1152, %v1156
    %vm1158 = vweird.f32 %v1139
    %vm1159 = vweird.f32 %v1152
    %vm1160 = vmor %vm1158, %vm1159
    %v1161 = vsel %vm1160, %v1152, %v1157
    %v1162 = vrsqrt.pop %v1140
    %v1163 = vmul.f32 %v1162, %v1140
    %v1164 = vmul.f32 %v1163, %v1162
    %v1165 = vmul.f32 0.5, %v1164
    %v1166 = vsub.f32 1.5, %v1165
    %v1167 = vmul.f32 %v1162, %v1166
    %vm1168 = vweird.f32 %v1140
    %vm1169 = vweird.f32 %v1162
    %vm1170 = vmor %vm1168, %vm1169
    %v1171 = vsel %vm1170, %v1162, %v1167
    %v1172 = vrsqrt.pop %v1141
    %v1173 = vmul.f32 %v1172, %v1141
    %v1174 = vmul.f32 %v1173, %v1172
    %v1175 = vmul.f32 0.5, %v1174
    %v1176 = vsub.f32 1.5, %v1175
    %v1177 = vmul.f32 %v1172, %v1176
    %vm1178 = vweird.f32 %v1141
    %vm1179 = vweird.f32 %v1172
    %vm1180 = vmor %vm1178, %vm1179
    %v1181 = vsel %vm1180, %v1172, %v1177
    %v1182 = vmul.f32 %v1114, %v1151
    %v1183 = vmul.f32 %v1115, %v1161
    %v1184 = vmul.f32 %v1116, %v1171
    %v1185 = vmul.f32 %v1117, %v1181
    %v1186 = vld [vmem:[%s9] sm:$0x1]
    %v1188 = vperm.slane %v1186, 0
    %v1190 = vmul.f32 %v1182, %v1188
    %v1191 = vmul.f32 %v1183, %v1188
    %v1192 = vmul.f32 %v1184, %v1188
    %v1193 = vmul.f32 %v1185, %v1188
    %v1194 = vpack.c.bf16 %v1191, %v1190
    %v1195 = vpack.c.bf16 %v1193, %v1192
    %v1196 = vld [vmem:[#allocation15] sm:$0xff]
    %v1197 = vld [vmem:[#allocation15 + $0x8] sm:$0xff]
    %v1198 = vld [vmem:[#allocation15 + $0x10] sm:$0xff]
    %v1199 = vld [vmem:[#allocation15 + $0x18] sm:$0xff]
    %v1200 = vld [vmem:[#allocation15 + $0x20] sm:$0xff]
    %v1201 = vld [vmem:[#allocation15 + $0x28] sm:$0xff]
    %v1202 = vld [vmem:[#allocation15 + $0x30] sm:$0xff]
    %v1203 = vld [vmem:[#allocation15 + $0x38] sm:$0xff]
    %v1212 = vunpack.c.l.b16 %v1196
    %v1213 = vunpack.c.h.b16 %v1196
    %v1214 = vunpack.c.l.b16 %v1197
    %v1215 = vunpack.c.h.b16 %v1197
    %v1216 = vunpack.c.l.b16 %v1198
    %v1217 = vunpack.c.h.b16 %v1198
    %v1218 = vunpack.c.l.b16 %v1199
    %v1219 = vunpack.c.h.b16 %v1199
    %v1220 = vunpack.c.l.b16 %v1200
    %v1221 = vunpack.c.h.b16 %v1200
    %v1222 = vunpack.c.l.b16 %v1201
    %v1223 = vunpack.c.h.b16 %v1201
    %v1224 = vunpack.c.l.b16 %v1202
    %v1225 = vunpack.c.h.b16 %v1202
    %v1226 = vunpack.c.l.b16 %v1203
    %v1227 = vunpack.c.h.b16 %v1203
    %v1228 = vpack.c.b16 %v1214, %v1212
    %v1229 = vpack.c.b16 %v1215, %v1213
    %v1230 = vpack.c.b16 %v1218, %v1216
    %v1231 = vpack.c.b16 %v1219, %v1217
    %v1232 = vpack.c.b16 %v1222, %v1220
    %v1233 = vpack.c.b16 %v1223, %v1221
    %v1234 = vpack.c.b16 %v1226, %v1224
    %v1235 = vpack.c.b16 %v1227, %v1225
    %v1245 = vsel %vm163, %v1194, 0
    %v1248 = vsel %vm163, %v1195, 0
    %1250 = vmatpush.bf16.msra.mxu0 0
    %1251 = vmatpush.bf16.msra.mxu0 0
    %1252 = vmatpush.bf16.msra.mxu0 0
    %1253 = vmatpush.bf16.msra.mxu0 0
    %1254 = vmatpush.bf16.msra.mxu0 %v1234
    %1255 = vmatpush.bf16.msra.mxu0 %v1232
    %1256 = vmatpush.bf16.msra.mxu0 %v1230
    %1257 = vmatpush.bf16.msra.mxu0 %v1228
    %1258 = vmatmul.bf16.gmra.mxu0 %v1245
    %v1259 = vpop.f32.mrf.mxu0
    %v1260 = vadd.f32 0.0, %v1259
    %v1261 = vpop.f32.mrf.mxu0
    %v1262 = vadd.f32 0.0, %v1261
    %1263 = vmatmul.bf16.gmra.mxu0 %v1248
    %v1264 = vpop.f32.mrf.mxu0
    %v1265 = vadd.f32 0.0, %v1264
    %v1266 = vpop.f32.mrf.mxu0
    %v1267 = vadd.f32 0.0, %v1266
    %1268 = vdwg.mxu0
    %1269 = vmatpush.bf16.msra.mxu0 0
    %1270 = vmatpush.bf16.msra.mxu0 0
    %1271 = vmatpush.bf16.msra.mxu0 0
    %1272 = vmatpush.bf16.msra.mxu0 0
    %1273 = vmatpush.bf16.msra.mxu0 %v1235
    %1274 = vmatpush.bf16.msra.mxu0 %v1233
    %1275 = vmatpush.bf16.msra.mxu0 %v1231
    %1276 = vmatpush.bf16.msra.mxu0 %v1229
    %1277 = vmatmul.bf16.gmra.mxu0 %v1245
    %v1278 = vpop.f32.mrf.mxu0
    %v1279 = vadd.f32 0.0, %v1278
    %v1280 = vpop.f32.mrf.mxu0
    %v1281 = vadd.f32 0.0, %v1280
    %1282 = vmatmul.bf16.gmra.mxu0 %v1248
    %v1283 = vpop.f32.mrf.mxu0
    %v1284 = vadd.f32 0.0, %v1283
    %v1285 = vpop.f32.mrf.mxu0
    %v1286 = vadd.f32 0.0, %v1285
    %1287 = vdwg.mxu0
    %v1288 = vxor.u32 %v1260, 2147483648
    %v1289 = vxor.u32 %v1262, 2147483648
    %v1290 = vxor.u32 %v1265, 2147483648
    %v1291 = vxor.u32 %v1267, 2147483648
    %v1292 = vmul.f32 %v1288, 1.442695
    %v1293 = vpow.pop %v1292
    %v1294 = vmul.f32 %v1289, 1.442695
    %v1295 = vpow.pop %v1294
    %v1296 = vmul.f32 %v1290, 1.442695
    %v1297 = vpow.pop %v1296
    %v1298 = vmul.f32 %v1291, 1.442695
    %v1299 = vpow.pop %v1298
    %v1300 = vadd.f32 %v1293, 1.0
    %v1301 = vadd.f32 %v1295, 1.0
    %v1302 = vadd.f32 %v1297, 1.0
    %v1303 = vadd.f32 %v1299, 1.0
    %v1304 = vrcp.pop %v1300
    %v1305 = vmul.f32 %v1300, %v1304
    %v1306 = vsub.f32 1.0, %v1305
    %v1307 = vmul.f32 %v1304, %v1306
    %v1308 = vadd.f32 %v1304, %v1307
    %vm1309 = vweird.f32 %v1300
    %vm1310 = vweird.f32 %v1304
    %vm1311 = vmor %vm1309, %vm1310
    %v1312 = vsel %vm1311, %v1304, %v1308
    %v1313 = vand.u32 2147483647, %v1300
    %vm1314 = vcmp.eq.f32.partialorder %v1313, 8.507059e+37
    %v1315 = vand.u32 %v1300, 2147483648
    %v1316 = vor.u32 1.1754944e-38, %v1315
    %v1317 = vsel %vm1314, %v1316, %v1312
    %v1318 = vmul.f32 1.0, %v1317
    %v1319 = vrcp.pop %v1301
    %v1320 = vmul.f32 %v1301, %v1319
    %v1321 = vsub.f32 1.0, %v1320
    %v1322 = vmul.f32 %v1319, %v1321
    %v1323 = vadd.f32 %v1319, %v1322
    %vm1324 = vweird.f32 %v1301
    %vm1325 = vweird.f32 %v1319
    %vm1326 = vmor %vm1324, %vm1325
    %v1327 = vsel %vm1326, %v1319, %v1323
    %v1328 = vand.u32 2147483647, %v1301
    %vm1329 = vcmp.eq.f32.partialorder %v1328, 8.507059e+37
    %v1330 = vand.u32 %v1301, 2147483648
    %v1331 = vor.u32 1.1754944e-38, %v1330
    %v1332 = vsel %vm1329, %v1331, %v1327
    %v1333 = vmul.f32 1.0, %v1332
    %v1334 = vrcp.pop %v1302
    %v1335 = vmul.f32 %v1302, %v1334
    %v1336 = vsub.f32 1.0, %v1335
    %v1337 = vmul.f32 %v1334, %v1336
    %v1338 = vadd.f32 %v1334, %v1337
    %vm1339 = vweird.f32 %v1302
    %vm1340 = vweird.f32 %v1334
    %vm1341 = vmor %vm1339, %vm1340
    %v1342 = vsel %vm1341, %v1334, %v1338
    %v1343 = vand.u32 2147483647, %v1302
    %vm1344 = vcmp.eq.f32.partialorder %v1343, 8.507059e+37
    %v1345 = vand.u32 %v1302, 2147483648
    %v1346 = vor.u32 1.1754944e-38, %v1345
    %v1347 = vsel %vm1344, %v1346, %v1342
    %v1348 = vmul.f32 1.0, %v1347
    %v1349 = vrcp.pop %v1303
    %v1350 = vmul.f32 %v1303, %v1349
    %v1351 = vsub.f32 1.0, %v1350
    %v1352 = vmul.f32 %v1349, %v1351
    %v1353 = vadd.f32 %v1349, %v1352
    %vm1354 = vweird.f32 %v1303
    %vm1355 = vweird.f32 %v1349
    %vm1356 = vmor %vm1354, %vm1355
    %v1357 = vsel %vm1356, %v1349, %v1353
    %v1358 = vand.u32 2147483647, %v1303
    %vm1359 = vcmp.eq.f32.partialorder %v1358, 8.507059e+37
    %v1360 = vand.u32 %v1303, 2147483648
    %v1361 = vor.u32 1.1754944e-38, %v1360
    %v1362 = vsel %vm1359, %v1361, %v1357
    %v1363 = vmul.f32 1.0, %v1362
    %v1364 = vmul.f32 %v1260, %v1318
    %v1365 = vmul.f32 %v1262, %v1333
    %v1366 = vmul.f32 %v1265, %v1348
    %v1367 = vmul.f32 %v1267, %v1363
    %v1368 = vmul.f32 %v1364, %v1279
    %v1369 = vmul.f32 %v1365, %v1281
    %v1370 = vmul.f32 %v1366, %v1284
    %v1371 = vmul.f32 %v1367, %v1286
    %v1372 = vpack.c.bf16 %v1369, %v1368
    %v1373 = vpack.c.bf16 %v1371, %v1370
    %v1374 = vld [vmem:[%s11] sm:$0xf]
    %v1375 = vld [vmem:[%s11 + $0x4] sm:$0xf]
    %v1376 = vld [vmem:[%s11 + $0x8] sm:$0xf]
    %v1377 = vld [vmem:[%s11 + $0xc] sm:$0xf]
    %v1378 = vld [vmem:[%s11 + $0x10] sm:$0xf]
    %v1379 = vld [vmem:[%s11 + $0x14] sm:$0xf]
    %v1380 = vld [vmem:[%s11 + $0x18] sm:$0xf]
    %v1381 = vld [vmem:[%s11 + $0x1c] sm:$0xf]
    %v1382 = vld [vmem:[%s11 + $0x20] sm:$0xf]
    %v1383 = vld [vmem:[%s11 + $0x24] sm:$0xf]
    %v1384 = vld [vmem:[%s11 + $0x28] sm:$0xf]
    %v1385 = vld [vmem:[%s11 + $0x2c] sm:$0xf]
    %v1386 = vld [vmem:[%s11 + $0x30] sm:$0xf]
    %v1387 = vld [vmem:[%s11 + $0x34] sm:$0xf]
    %v1388 = vld [vmem:[%s11 + $0x38] sm:$0xf]
    %v1389 = vld [vmem:[%s11 + $0x3c] sm:$0xf]
    %v1406 = vunpack.c.l.b16 %v1374
    %v1407 = vunpack.c.l.b16 %v1375
    %v1408 = vunpack.c.l.b16 %v1376
    %v1409 = vunpack.c.l.b16 %v1377
    %v1410 = vunpack.c.l.b16 %v1378
    %v1411 = vunpack.c.l.b16 %v1379
    %v1412 = vunpack.c.l.b16 %v1380
    %v1413 = vunpack.c.l.b16 %v1381
    %v1414 = vunpack.c.l.b16 %v1382
    %v1415 = vunpack.c.l.b16 %v1383
    %v1416 = vunpack.c.l.b16 %v1384
    %v1417 = vunpack.c.l.b16 %v1385
    %v1418 = vunpack.c.l.b16 %v1386
    %v1419 = vunpack.c.l.b16 %v1387
    %v1420 = vunpack.c.l.b16 %v1388
    %v1421 = vunpack.c.l.b16 %v1389
    %v1422 = vpack.c.b16 %v1407, %v1406
    %v1423 = vpack.c.b16 %v1409, %v1408
    %v1424 = vpack.c.b16 %v1411, %v1410
    %v1425 = vpack.c.b16 %v1413, %v1412
    %v1426 = vpack.c.b16 %v1415, %v1414
    %v1427 = vpack.c.b16 %v1417, %v1416
    %v1428 = vpack.c.b16 %v1419, %v1418
    %v1429 = vpack.c.b16 %v1421, %v1420
    %1438 = vmatpush.bf16.msra.mxu0 %v1429
    %1439 = vmatpush.bf16.msra.mxu0 %v1428
    %1440 = vmatpush.bf16.msra.mxu0 %v1427
    %1441 = vmatpush.bf16.msra.mxu0 %v1426
    %1442 = vmatpush.bf16.msra.mxu0 %v1425
    %1443 = vmatpush.bf16.msra.mxu0 %v1424
    %1444 = vmatpush.bf16.msra.mxu0 %v1423
    %1445 = vmatpush.bf16.msra.mxu0 %v1422
    %1446 = vmatmul.bf16.gmra.mxu0 %v1372
    %v1447 = vpop.f32.mrf.mxu0
    %v1448 = vadd.f32 0.0, %v1447
    %v1449 = vpop.f32.mrf.mxu0
    %v1450 = vadd.f32 0.0, %v1449
    %1451 = vmatmul.bf16.gmra.mxu0 %v1373
    %v1452 = vpop.f32.mrf.mxu0
    %v1453 = vadd.f32 0.0, %v1452
    %v1454 = vpop.f32.mrf.mxu0
    %v1455 = vadd.f32 0.0, %v1454
    %1456 = vdwg.mxu0
    %v1457 = vadd.f32 %v1114, %v1448
    %v1458 = vadd.f32 %v1115, %v1450
    %v1459 = vadd.f32 %v1116, %v1453
    %v1460 = vadd.f32 %v1117, %v1455
    %1461 = vst.msk [vmem:[#allocation17] sm:$0xff] %vm163, %v1457
    %1462 = vst.msk [vmem:[#allocation17 + $0x8] sm:$0xff] %vm163, %v1458
    %1463 = vst.msk [vmem:[#allocation17 + $0x10] sm:$0xff] %vm163, %v1459
    %1464 = vst.msk [vmem:[#allocation17 + $0x18] sm:$0xff] %vm163, %v1460
    // Predicated region
    $region70: #{tpu_custom_call.1} parent=1 // pred_check
      _
    $region71: #{tpu_custom_call.1} parent=1 // pred_check_branch
      %1466 = sbr.rel (0) target = $region73
    $region72: #{tpu_custom_call.1} parent=1 // pred_region
      %1468 = vsyncadd [#allocation8], 0
      %s1469 = sshll.u32 [#allocation17], 4
      %s1470 = int_to_ptr.vmem [resolvable:$true] %s1469
      %s1471 = sshll.u32 %s12, 4
      %s1472 = int_to_ptr.hbm [resolvable:$true] %s1471
      %1477 = dma.vmem_to_hbm [thread:$0]  %s1470, 512, %s1472, [#allocation8], 128, 128, 8
    $region73: #{tpu_custom_call.1} parent=1 // pred_fallthru
      _
    // Predicated region
    $region74: #{tpu_custom_call.1} parent=1 // pred_check
      _
    $region75: #{tpu_custom_call.1} parent=1 // pred_check_branch
      %1479 = sbr.rel (0) target = $region77
    $region76: #{tpu_custom_call.1} parent=1 // pred_region
      %1481 = dma.done [#allocation8], 512
    $region77: #{tpu_custom_call.1} parent=1 // pred_fallthru
      _
    %1482 = vsyncpa [#allocation7], 1
    %1483 = vsyncpa [#allocation10], 1
    %1484 = vsyncpa [#allocation13], 1
    %1485 = vsyncpa [#allocation16], 1
    %1486 = vsyncpa [#allocation8], 1

</llo_original>
